<compile_context>
chip_gen: v5e
topology: v5e:2x2
jax: 0.10.0
libtpu: 0.0.40
codegen_flags: <defaults>
</compile_context>

<pallas_src>
import functools

import jax
import jax.numpy as jnp
from jax.experimental import pallas as pl
from jax.experimental.pallas import tpu as pltpu


def _round_up(x, m):
    return (x + m - 1) // m * m


def _pad2d(a, rows, cols):
    return jnp.pad(a, ((0, rows - a.shape[0]), (0, cols - a.shape[1])))


def _deepset_kernel(inv_n,
                    x_ref, pool_ref,
                    w1, b1, w2, b2, w3, b3, w4, b4,      # encoder
                    v1, c1, v2, c2, v3, c3, v4, c4,      # decoder
                    out_ref):
    bf16 = jnp.bfloat16

    def dense(x_bf16, w_ref, b_ref, relu=True):
        # bf16 operands on the MXU, f32 accumulate; bias/ReLU epilogue in f32 (VPU).
        y = jnp.dot(x_bf16, w_ref[...], preferred_element_type=jnp.float32) + b_ref[...]
        if relu:
            y = jnp.maximum(y, 0.0)
        return y.astype(bf16)

    # ---- encoder: per-element MLP on the (TB*N, D_pad) block ----
    h = dense(x_ref[...], w1, b1)
    h = dense(h, w2, b2)
    h = dense(h, w3, b3)
    h = dense(h, w4, b4, relu=False)                      # (TB*N, H_pad) bf16

    # ---- mean over the set axis on the MXU: block-diag ones @ h, 1/N scale in f32 ----
    pooled = jnp.dot(pool_ref[...], h, preferred_element_type=jnp.float32) * inv_n
    pooled = pooled.astype(bf16)                          # (TB, H_pad)

    # ---- decoder: per-set MLP ----
    d = dense(pooled, v1, c1)
    d = dense(d, v2, c2)
    d = dense(d, v3, c3)
    d = jnp.dot(d, v4[...], preferred_element_type=jnp.float32) + c4[...]
    out_ref[...] = d                                      # lane-dense (TB, O_pad) f32 store


def deepset_forward(X, params, num_outputs, dim_output, *, tb=None):
    """X: (B, N, dim_input) float32. params: dict of (in,out) weights / (1,out) biases."""
    B, N, d_in = X.shape
    H = params["w1"].shape[1]
    out_dim = num_outputs * dim_output

    # ---- lane-dense padded feature dims (multiples of 128) ----
    d_pad = _round_up(d_in, 128)
    h_pad = _round_up(H, 128)
    o_pad = _round_up(out_dim, 128)

    # ---- batch tiling: TB sets per grid step, TB a multiple of 8 ----
    if tb is None:
        tb = min(B, max(1, 512 // N))        # ~512 element rows per block (v7x-safe)
    tb = max(8, _round_up(tb, 8))
    b_pad = _round_up(B, tb)
    grid = b_pad // tb
    rows_blk = tb * N

    # ---- pad + cast inputs / params (zero padding is exact through ReLU/mean) ----
    x = jnp.pad(X, ((0, b_pad - B), (0, 0), (0, d_pad - d_in)))
    x2d = x.reshape(b_pad * N, d_pad).astype(jnp.bfloat16)

    def wpad(name, r, c):
        return _pad2d(params[name], r, c).astype(jnp.bfloat16)

    def bpad(name, c):
        return _pad2d(params[name], 1, c).astype(jnp.float32)

    weights = (
        wpad("w1", d_pad, h_pad), bpad("b1", h_pad),
        wpad("w2", h_pad, h_pad), bpad("b2", h_pad),
        wpad("w3", h_pad, h_pad), bpad("b3", h_pad),
        wpad("w4", h_pad, h_pad), bpad("b4", h_pad),
        wpad("v1", h_pad, h_pad), bpad("c1", h_pad),
        wpad("v2", h_pad, h_pad), bpad("c2", h_pad),
        wpad("v3", h_pad, h_pad), bpad("c3", h_pad),
        wpad("v4", h_pad, o_pad), bpad("c4", o_pad),
    )

    # Block-diagonal pooling matrix (ones; the 1/N scale is applied in f32 in-kernel).
    row = jnp.arange(tb)[:, None]
    col = jnp.arange(rows_blk)[None, :]
    pool = jnp.where(col // N == row, 1.0, 0.0).astype(jnp.bfloat16)

    x_spec = pl.BlockSpec((rows_blk, d_pad), lambda i: (i, 0))
    pool_spec = pl.BlockSpec((tb, rows_blk), lambda i: (0, 0))
    const_spec = lambda s: pl.BlockSpec(s, lambda i: (0, 0))   # weights: loaded once
    w_specs = [const_spec(w.shape) for w in weights]
    out_spec = pl.BlockSpec((tb, o_pad), lambda i: (i, 0))

    # Explicit VMEM budget (sized for 64 MiB/TC on v7x; generous margin, tiny here).
    est = (
        sum(a.size * a.dtype.itemsize for a in weights)
        + pool.size * 2
        + 2 * rows_blk * d_pad * 2          # double-buffered input tile (bf16)
        + 2 * tb * o_pad * 4                # double-buffered output tile (f32)
        + 6 * rows_blk * h_pad * 4          # activation working set
    )
    vmem_limit = int(min(max(2 * est, 32 * 2**20), 64 * 2**20))

    out = pl.pallas_call(
        functools.partial(_deepset_kernel, 1.0 / N),
        out_shape=jax.ShapeDtypeStruct((b_pad, o_pad), jnp.float32),
        grid_spec=pltpu.PrefetchScalarGridSpec(
            num_scalar_prefetch=0,
            grid=(grid,),
            in_specs=[x_spec, pool_spec] + w_specs,
            out_specs=out_spec,
        ),
        compiler_params=pltpu.CompilerParams(
            dimension_semantics=("parallel",),
            vmem_limit_bytes=vmem_limit,
        ),
    )(x2d, pool, *weights)

    return out[:B, :out_dim].reshape(B, num_outputs, dim_output)


def _linear_params(key, fan_in, fan_out):
    """Deterministic init mimicking nn.Linear's uniform(-1/sqrt(fan_in), 1/sqrt(fan_in))."""
    kw, kb = jax.random.split(key)
    bound = 1.0 / jnp.sqrt(fan_in)
    w = jax.random.uniform(kw, (fan_in, fan_out), jnp.float32, -bound, bound)
    b = jax.random.uniform(kb, (1, fan_out), jnp.float32, -bound, bound)
    return w, b


def make_params(key, dim_input, dim_hidden, num_outputs, dim_output):
    keys = jax.random.split(key, 8)
    p = {}
    # encoder
    p["w1"], p["b1"] = _linear_params(keys[0], dim_input, dim_hidden)
    p["w2"], p["b2"] = _linear_params(keys[1], dim_hidden, dim_hidden)
    p["w3"], p["b3"] = _linear_params(keys[2], dim_hidden, dim_hidden)
    p["w4"], p["b4"] = _linear_params(keys[3], dim_hidden, dim_hidden)
    # decoder
    p["v1"], p["c1"] = _linear_params(keys[4], dim_hidden, dim_hidden)
    p["v2"], p["c2"] = _linear_params(keys[5], dim_hidden, dim_hidden)
    p["v3"], p["c3"] = _linear_params(keys[6], dim_hidden, dim_hidden)
    p["v4"], p["c4"] = _linear_params(keys[7], dim_hidden, num_outputs * dim_output)
    return p


def deepset_reference(X, p, num_outputs, dim_output):
    """Pure-JAX f32 reference mirroring the PyTorch forward exactly."""
    relu = lambda z: jnp.maximum(z, 0.0)
    h = relu(X @ p["w1"] + p["b1"])
    h = relu(h @ p["w2"] + p["b2"])
    h = relu(h @ p["w3"] + p["b3"])
    h = h @ p["w4"] + p["b4"]
    h = h.mean(-2)
    d = relu(h @ p["v1"] + p["c1"])
    d = relu(d @ p["v2"] + p["c2"])
    d = relu(d @ p["v3"] + p["c3"])
    d = d @ p["v4"] + p["c4"]
    return d.reshape(-1, num_outputs, dim_output)


if __name__ == "__main__":
    B, N = 16, 8                      # 16 sets of 8 elements
    dim_input, dim_hidden = 16, 128   # dim_hidden matches the module default (lane-dense)
    num_outputs, dim_output = 4, 8

    key = jax.random.PRNGKey(0)
    kx, kp = jax.random.split(key)
    X = jax.random.normal(kx, (B, N, dim_input), jnp.float32)
    params = make_params(kp, dim_input, dim_hidden, num_outputs, dim_output)

    out = deepset_forward(X, params, num_outputs, dim_output, tb=8)  # grid=(2,)
    out = jax.block_until_ready(out)

    ref = deepset_reference(X, params, num_outputs, dim_output)
    assert out.shape == (B, num_outputs, dim_output), out.shape
    # bf16 MXU inputs / f32 accumulation -> small deviation from the all-f32 reference.
    max_err = float(jnp.max(jnp.abs(out - ref)))
    assert jnp.allclose(out, ref, atol=3e-2, rtol=3e-2), max_err

    print("KERNEL_OK")
</pallas_src>

<mosaic_0001>
module attributes {stable_mosaic.version = 11 : i64} {
  func.func @_deepset_kernel(%arg0: i32, %arg1: memref<64x128xbf16, #tpu.memory_space<vmem>>, %arg2: memref<8x64xbf16, #tpu.memory_space<vmem>>, %arg3: memref<128x128xbf16, #tpu.memory_space<vmem>>, %arg4: memref<1x128xf32, #tpu.memory_space<vmem>>, %arg5: memref<128x128xbf16, #tpu.memory_space<vmem>>, %arg6: memref<1x128xf32, #tpu.memory_space<vmem>>, %arg7: memref<128x128xbf16, #tpu.memory_space<vmem>>, %arg8: memref<1x128xf32, #tpu.memory_space<vmem>>, %arg9: memref<128x128xbf16, #tpu.memory_space<vmem>>, %arg10: memref<1x128xf32, #tpu.memory_space<vmem>>, %arg11: memref<128x128xbf16, #tpu.memory_space<vmem>>, %arg12: memref<1x128xf32, #tpu.memory_space<vmem>>, %arg13: memref<128x128xbf16, #tpu.memory_space<vmem>>, %arg14: memref<1x128xf32, #tpu.memory_space<vmem>>, %arg15: memref<128x128xbf16, #tpu.memory_space<vmem>>, %arg16: memref<1x128xf32, #tpu.memory_space<vmem>>, %arg17: memref<128x128xbf16, #tpu.memory_space<vmem>>, %arg18: memref<1x128xf32, #tpu.memory_space<vmem>>, %arg19: memref<8x128xf32, #tpu.memory_space<vmem>>) attributes {dimension_semantics = [#tpu.dimension_semantics<parallel>], iteration_bounds = array<i64: 2>, scalar_prefetch = 0 : i64, scratch_operands = 0 : i64, tpu.core_type = #tpu.core_type<tc>, window_params = [{transform_indices = @transform_0, window_bounds = array<i64: 64, 128>}, {pipeline_mode = #tpu.pipeline_mode<synchronous>, transform_indices = @transform_1, window_bounds = array<i64: 8, 64>}, {pipeline_mode = #tpu.pipeline_mode<synchronous>, transform_indices = @transform_2, window_bounds = array<i64: 128, 128>}, {pipeline_mode = #tpu.pipeline_mode<synchronous>, transform_indices = @transform_3, window_bounds = array<i64: 1, 128>}, {pipeline_mode = #tpu.pipeline_mode<synchronous>, transform_indices = @transform_4, window_bounds = array<i64: 128, 128>}, {pipeline_mode = #tpu.pipeline_mode<synchronous>, transform_indices = @transform_5, window_bounds = array<i64: 1, 128>}, {pipeline_mode = #tpu.pipeline_mode<synchronous>, transform_indices = @transform_6, window_bounds = array<i64: 128, 128>}, {pipeline_mode = #tpu.pipeline_mode<synchronous>, transform_indices = @transform_7, window_bounds = array<i64: 1, 128>}, {pipeline_mode = #tpu.pipeline_mode<synchronous>, transform_indices = @transform_8, window_bounds = array<i64: 128, 128>}, {pipeline_mode = #tpu.pipeline_mode<synchronous>, transform_indices = @transform_9, window_bounds = array<i64: 1, 128>}, {pipeline_mode = #tpu.pipeline_mode<synchronous>, transform_indices = @transform_10, window_bounds = array<i64: 128, 128>}, {pipeline_mode = #tpu.pipeline_mode<synchronous>, transform_indices = @transform_11, window_bounds = array<i64: 1, 128>}, {pipeline_mode = #tpu.pipeline_mode<synchronous>, transform_indices = @transform_12, window_bounds = array<i64: 128, 128>}, {pipeline_mode = #tpu.pipeline_mode<synchronous>, transform_indices = @transform_13, window_bounds = array<i64: 1, 128>}, {pipeline_mode = #tpu.pipeline_mode<synchronous>, transform_indices = @transform_14, window_bounds = array<i64: 128, 128>}, {pipeline_mode = #tpu.pipeline_mode<synchronous>, transform_indices = @transform_15, window_bounds = array<i64: 1, 128>}, {pipeline_mode = #tpu.pipeline_mode<synchronous>, transform_indices = @transform_16, window_bounds = array<i64: 128, 128>}, {pipeline_mode = #tpu.pipeline_mode<synchronous>, transform_indices = @transform_17, window_bounds = array<i64: 1, 128>}, {transform_indices = @transform_18, window_bounds = array<i64: 8, 128>}]} {
    %c0 = arith.constant 0 : index
    %c0_0 = arith.constant 0 : index
    %0 = vector.load %arg1[%c0, %c0_0] : memref<64x128xbf16, #tpu.memory_space<vmem>>, vector<64x128xbf16>
    %c0_1 = arith.constant 0 : index
    %c0_2 = arith.constant 0 : index
    %1 = vector.load %arg3[%c0_1, %c0_2] : memref<128x128xbf16, #tpu.memory_space<vmem>>, vector<128x128xbf16>
    %cst = arith.constant dense<0.000000e+00> : vector<64x128xf32>
    %2 = tpu.matmul %0, %1, %cst {dimension_numbers = #tpu.dot_dimension_numbers<[1], [0], [0], [1], [0, 0, 1, 1], [], []>} : vector<64x128xbf16>, vector<128x128xbf16>, vector<64x128xf32> -> vector<64x128xf32>
    %c0_3 = arith.constant 0 : index
    %c0_4 = arith.constant 0 : index
    %3 = vector.load %arg4[%c0_3, %c0_4] : memref<1x128xf32, #tpu.memory_space<vmem>>, vector<1x128xf32>
    %4 = vector.broadcast %3 : vector<1x128xf32> to vector<64x128xf32>
    %5 = arith.addf %2, %4 : vector<64x128xf32>
    %cst_5 = arith.constant 0.000000e+00 : f32
    %6 = vector.broadcast %cst_5 : f32 to vector<64x128xf32>
    %7 = arith.maximumf %5, %6 : vector<64x128xf32>
    %8 = arith.truncf %7 : vector<64x128xf32> to vector<64x128xbf16>
    %c0_6 = arith.constant 0 : index
    %c0_7 = arith.constant 0 : index
    %9 = vector.load %arg5[%c0_6, %c0_7] : memref<128x128xbf16, #tpu.memory_space<vmem>>, vector<128x128xbf16>
    %cst_8 = arith.constant dense<0.000000e+00> : vector<64x128xf32>
    %10 = tpu.matmul %8, %9, %cst_8 {dimension_numbers = #tpu.dot_dimension_numbers<[1], [0], [0], [1], [0, 0, 1, 1], [], []>} : vector<64x128xbf16>, vector<128x128xbf16>, vector<64x128xf32> -> vector<64x128xf32>
    %c0_9 = arith.constant 0 : index
    %c0_10 = arith.constant 0 : index
    %11 = vector.load %arg6[%c0_9, %c0_10] : memref<1x128xf32, #tpu.memory_space<vmem>>, vector<1x128xf32>
    %12 = vector.broadcast %11 : vector<1x128xf32> to vector<64x128xf32>
    %13 = arith.addf %10, %12 : vector<64x128xf32>
    %cst_11 = arith.constant 0.000000e+00 : f32
    %14 = vector.broadcast %cst_11 : f32 to vector<64x128xf32>
    %15 = arith.maximumf %13, %14 : vector<64x128xf32>
    %16 = arith.truncf %15 : vector<64x128xf32> to vector<64x128xbf16>
    %c0_12 = arith.constant 0 : index
    %c0_13 = arith.constant 0 : index
    %17 = vector.load %arg7[%c0_12, %c0_13] : memref<128x128xbf16, #tpu.memory_space<vmem>>, vector<128x128xbf16>
    %cst_14 = arith.constant dense<0.000000e+00> : vector<64x128xf32>
    %18 = tpu.matmul %16, %17, %cst_14 {dimension_numbers = #tpu.dot_dimension_numbers<[1], [0], [0], [1], [0, 0, 1, 1], [], []>} : vector<64x128xbf16>, vector<128x128xbf16>, vector<64x128xf32> -> vector<64x128xf32>
    %c0_15 = arith.constant 0 : index
    %c0_16 = arith.constant 0 : index
    %19 = vector.load %arg8[%c0_15, %c0_16] : memref<1x128xf32, #tpu.memory_space<vmem>>, vector<1x128xf32>
    %20 = vector.broadcast %19 : vector<1x128xf32> to vector<64x128xf32>
    %21 = arith.addf %18, %20 : vector<64x128xf32>
    %cst_17 = arith.constant 0.000000e+00 : f32
    %22 = vector.broadcast %cst_17 : f32 to vector<64x128xf32>
    %23 = arith.maximumf %21, %22 : vector<64x128xf32>
    %24 = arith.truncf %23 : vector<64x128xf32> to vector<64x128xbf16>
    %c0_18 = arith.constant 0 : index
    %c0_19 = arith.constant 0 : index
    %25 = vector.load %arg9[%c0_18, %c0_19] : memref<128x128xbf16, #tpu.memory_space<vmem>>, vector<128x128xbf16>
    %cst_20 = arith.constant dense<0.000000e+00> : vector<64x128xf32>
    %26 = tpu.matmul %24, %25, %cst_20 {dimension_numbers = #tpu.dot_dimension_numbers<[1], [0], [0], [1], [0, 0, 1, 1], [], []>} : vector<64x128xbf16>, vector<128x128xbf16>, vector<64x128xf32> -> vector<64x128xf32>
    %c0_21 = arith.constant 0 : index
    %c0_22 = arith.constant 0 : index
    %27 = vector.load %arg10[%c0_21, %c0_22] : memref<1x128xf32, #tpu.memory_space<vmem>>, vector<1x128xf32>
    %28 = vector.broadcast %27 : vector<1x128xf32> to vector<64x128xf32>
    %29 = arith.addf %26, %28 : vector<64x128xf32>
    %30 = arith.truncf %29 : vector<64x128xf32> to vector<64x128xbf16>
    %c0_23 = arith.constant 0 : index
    %c0_24 = arith.constant 0 : index
    %31 = vector.load %arg2[%c0_23, %c0_24] : memref<8x64xbf16, #tpu.memory_space<vmem>>, vector<8x64xbf16>
    %cst_25 = arith.constant dense<0.000000e+00> : vector<8x128xf32>
    %32 = tpu.matmul %31, %30, %cst_25 {dimension_numbers = #tpu.dot_dimension_numbers<[1], [0], [0], [1], [0, 0, 1, 1], [], []>} : vector<8x64xbf16>, vector<64x128xbf16>, vector<8x128xf32> -> vector<8x128xf32>
    %cst_26 = arith.constant 1.250000e-01 : f32
    %33 = vector.broadcast %cst_26 : f32 to vector<8x128xf32>
    %34 = arith.mulf %32, %33 : vector<8x128xf32>
    %35 = arith.truncf %34 : vector<8x128xf32> to vector<8x128xbf16>
    %c0_27 = arith.constant 0 : index
    %c0_28 = arith.constant 0 : index
    %36 = vector.load %arg11[%c0_27, %c0_28] : memref<128x128xbf16, #tpu.memory_space<vmem>>, vector<128x128xbf16>
    %cst_29 = arith.constant dense<0.000000e+00> : vector<8x128xf32>
    %37 = tpu.matmul %35, %36, %cst_29 {dimension_numbers = #tpu.dot_dimension_numbers<[1], [0], [0], [1], [0, 0, 1, 1], [], []>} : vector<8x128xbf16>, vector<128x128xbf16>, vector<8x128xf32> -> vector<8x128xf32>
    %c0_30 = arith.constant 0 : index
    %c0_31 = arith.constant 0 : index
    %38 = vector.load %arg12[%c0_30, %c0_31] : memref<1x128xf32, #tpu.memory_space<vmem>>, vector<1x128xf32>
    %39 = vector.broadcast %38 : vector<1x128xf32> to vector<8x128xf32>
    %40 = arith.addf %37, %39 : vector<8x128xf32>
    %cst_32 = arith.constant 0.000000e+00 : f32
    %41 = vector.broadcast %cst_32 : f32 to vector<8x128xf32>
    %42 = arith.maximumf %40, %41 : vector<8x128xf32>
    %43 = arith.truncf %42 : vector<8x128xf32> to vector<8x128xbf16>
    %c0_33 = arith.constant 0 : index
    %c0_34 = arith.constant 0 : index
    %44 = vector.load %arg13[%c0_33, %c0_34] : memref<128x128xbf16, #tpu.memory_space<vmem>>, vector<128x128xbf16>
    %cst_35 = arith.constant dense<0.000000e+00> : vector<8x128xf32>
    %45 = tpu.matmul %43, %44, %cst_35 {dimension_numbers = #tpu.dot_dimension_numbers<[1], [0], [0], [1], [0, 0, 1, 1], [], []>} : vector<8x128xbf16>, vector<128x128xbf16>, vector<8x128xf32> -> vector<8x128xf32>
    %c0_36 = arith.constant 0 : index
    %c0_37 = arith.constant 0 : index
    %46 = vector.load %arg14[%c0_36, %c0_37] : memref<1x128xf32, #tpu.memory_space<vmem>>, vector<1x128xf32>
    %47 = vector.broadcast %46 : vector<1x128xf32> to vector<8x128xf32>
    %48 = arith.addf %45, %47 : vector<8x128xf32>
    %cst_38 = arith.constant 0.000000e+00 : f32
    %49 = vector.broadcast %cst_38 : f32 to vector<8x128xf32>
    %50 = arith.maximumf %48, %49 : vector<8x128xf32>
    %51 = arith.truncf %50 : vector<8x128xf32> to vector<8x128xbf16>
    %c0_39 = arith.constant 0 : index
    %c0_40 = arith.constant 0 : index
    %52 = vector.load %arg15[%c0_39, %c0_40] : memref<128x128xbf16, #tpu.memory_space<vmem>>, vector<128x128xbf16>
    %cst_41 = arith.constant dense<0.000000e+00> : vector<8x128xf32>
    %53 = tpu.matmul %51, %52, %cst_41 {dimension_numbers = #tpu.dot_dimension_numbers<[1], [0], [0], [1], [0, 0, 1, 1], [], []>} : vector<8x128xbf16>, vector<128x128xbf16>, vector<8x128xf32> -> vector<8x128xf32>
    %c0_42 = arith.constant 0 : index
    %c0_43 = arith.constant 0 : index
    %54 = vector.load %arg16[%c0_42, %c0_43] : memref<1x128xf32, #tpu.memory_space<vmem>>, vector<1x128xf32>
    %55 = vector.broadcast %54 : vector<1x128xf32> to vector<8x128xf32>
    %56 = arith.addf %53, %55 : vector<8x128xf32>
    %cst_44 = arith.constant 0.000000e+00 : f32
    %57 = vector.broadcast %cst_44 : f32 to vector<8x128xf32>
    %58 = arith.maximumf %56, %57 : vector<8x128xf32>
    %59 = arith.truncf %58 : vector<8x128xf32> to vector<8x128xbf16>
    %c0_45 = arith.constant 0 : index
    %c0_46 = arith.constant 0 : index
    %60 = vector.load %arg17[%c0_45, %c0_46] : memref<128x128xbf16, #tpu.memory_space<vmem>>, vector<128x128xbf16>
    %cst_47 = arith.constant dense<0.000000e+00> : vector<8x128xf32>
    %61 = tpu.matmul %59, %60, %cst_47 {dimension_numbers = #tpu.dot_dimension_numbers<[1], [0], [0], [1], [0, 0, 1, 1], [], []>} : vector<8x128xbf16>, vector<128x128xbf16>, vector<8x128xf32> -> vector<8x128xf32>
    %c0_48 = arith.constant 0 : index
    %c0_49 = arith.constant 0 : index
    %62 = vector.load %arg18[%c0_48, %c0_49] : memref<1x128xf32, #tpu.memory_space<vmem>>, vector<1x128xf32>
    %63 = vector.broadcast %62 : vector<1x128xf32> to vector<8x128xf32>
    %64 = arith.addf %61, %63 : vector<8x128xf32>
    %c0_50 = arith.constant 0 : index
    %c0_51 = arith.constant 0 : index
    %65 = vector.load %arg19[%c0_50, %c0_51] : memref<8x128xf32, #tpu.memory_space<vmem>>, vector<8x128xf32>
    tpu.vector_store %arg19[%c0_50, %c0_51], %64 {strides = array<i32>} : memref<8x128xf32, #tpu.memory_space<vmem>>, vector<8x128xf32>,
    return
  }
  func.func @transform_0(%arg0: i32) -> (i32, i32) {
    %c0_i32 = arith.constant 0 : i32
    %c0_i32_0 = arith.constant 0 : i32
    return %arg0, %c0_i32 : i32, i32
  }
  func.func @transform_1(%arg0: i32) -> (i32, i32) {
    %c0_i32 = arith.constant 0 : i32
    %c0_i32_0 = arith.constant 0 : i32
    %c0_i32_1 = arith.constant 0 : i32
    return %c0_i32, %c0_i32_0 : i32, i32
  }
  func.func @transform_2(%arg0: i32) -> (i32, i32) {
    %c0_i32 = arith.constant 0 : i32
    %c0_i32_0 = arith.constant 0 : i32
    %c0_i32_1 = arith.constant 0 : i32
    return %c0_i32, %c0_i32_0 : i32, i32
  }
  func.func @transform_3(%arg0: i32) -> (i32, i32) {
    %c0_i32 = arith.constant 0 : i32
    %c0_i32_0 = arith.constant 0 : i32
    %c0_i32_1 = arith.constant 0 : i32
    return %c0_i32, %c0_i32_0 : i32, i32
  }
  func.func @transform_4(%arg0: i32) -> (i32, i32) {
    %c0_i32 = arith.constant 0 : i32
    %c0_i32_0 = arith.constant 0 : i32
    %c0_i32_1 = arith.constant 0 : i32
    return %c0_i32, %c0_i32_0 : i32, i32
  }
  func.func @transform_5(%arg0: i32) -> (i32, i32) {
    %c0_i32 = arith.constant 0 : i32
    %c0_i32_0 = arith.constant 0 : i32
    %c0_i32_1 = arith.constant 0 : i32
    return %c0_i32, %c0_i32_0 : i32, i32
  }
  func.func @transform_6(%arg0: i32) -> (i32, i32) {
    %c0_i32 = arith.constant 0 : i32
    %c0_i32_0 = arith.constant 0 : i32
    %c0_i32_1 = arith.constant 0 : i32
    return %c0_i32, %c0_i32_0 : i32, i32
  }
  func.func @transform_7(%arg0: i32) -> (i32, i32) {
    %c0_i32 = arith.constant 0 : i32
    %c0_i32_0 = arith.constant 0 : i32
    %c0_i32_1 = arith.constant 0 : i32
    return %c0_i32, %c0_i32_0 : i32, i32
  }
  func.func @transform_8(%arg0: i32) -> (i32, i32) {
    %c0_i32 = arith.constant 0 : i32
    %c0_i32_0 = arith.constant 0 : i32
    %c0_i32_1 = arith.constant 0 : i32
    return %c0_i32, %c0_i32_0 : i32, i32
  }
  func.func @transform_9(%arg0: i32) -> (i32, i32) {
    %c0_i32 = arith.constant 0 : i32
    %c0_i32_0 = arith.constant 0 : i32
    %c0_i32_1 = arith.constant 0 : i32
    return %c0_i32, %c0_i32_0 : i32, i32
  }
  func.func @transform_10(%arg0: i32) -> (i32, i32) {
    %c0_i32 = arith.constant 0 : i32
    %c0_i32_0 = arith.constant 0 : i32
    %c0_i32_1 = arith.constant 0 : i32
    return %c0_i32, %c0_i32_0 : i32, i32
  }
  func.func @transform_11(%arg0: i32) -> (i32, i32) {
    %c0_i32 = arith.constant 0 : i32
    %c0_i32_0 = arith.constant 0 : i32
    %c0_i32_1 = arith.constant 0 : i32
    return %c0_i32, %c0_i32_0 : i32, i32
  }
  func.func @transform_12(%arg0: i32) -> (i32, i32) {
    %c0_i32 = arith.constant 0 : i32
    %c0_i32_0 = arith.constant 0 : i32
    %c0_i32_1 = arith.constant 0 : i32
    return %c0_i32, %c0_i32_0 : i32, i32
  }
  func.func @transform_13(%arg0: i32) -> (i32, i32) {
    %c0_i32 = arith.constant 0 : i32
    %c0_i32_0 = arith.constant 0 : i32
    %c0_i32_1 = arith.constant 0 : i32
    return %c0_i32, %c0_i32_0 : i32, i32
  }
  func.func @transform_14(%arg0: i32) -> (i32, i32) {
    %c0_i32 = arith.constant 0 : i32
    %c0_i32_0 = arith.constant 0 : i32
    %c0_i32_1 = arith.constant 0 : i32
    return %c0_i32, %c0_i32_0 : i32, i32
  }
  func.func @transform_15(%arg0: i32) -> (i32, i32) {
    %c0_i32 = arith.constant 0 : i32
    %c0_i32_0 = arith.constant 0 : i32
    %c0_i32_1 = arith.constant 0 : i32
    return %c0_i32, %c0_i32_0 : i32, i32
  }
  func.func @transform_16(%arg0: i32) -> (i32, i32) {
    %c0_i32 = arith.constant 0 : i32
    %c0_i32_0 = arith.constant 0 : i32
    %c0_i32_1 = arith.constant 0 : i32
    return %c0_i32, %c0_i32_0 : i32, i32
  }
  func.func @transform_17(%arg0: i32) -> (i32, i32) {
    %c0_i32 = arith.constant 0 : i32
    %c0_i32_0 = arith.constant 0 : i32
    %c0_i32_1 = arith.constant 0 : i32
    return %c0_i32, %c0_i32_0 : i32, i32
  }
  func.func @transform_18(%arg0: i32) -> (i32, i32) {
    %c0_i32 = arith.constant 0 : i32
    %c0_i32_0 = arith.constant 0 : i32
    return %arg0, %c0_i32 : i32, i32
  }
}

</mosaic_0001>

<llo_original>
// kernel: tpu_custom_call.1
$region0: #{tpu_custom_call.1}
  #allocation0 [shape = 'u32[]', space=smem, size = 0x4, offset = 0x4, fixed_abs, tag = 'smem constant byte address 0x4 - core index']
  #allocation1 [shape = 'u32[72,128]{1,0:T(1,128)}', space=vmem, size = 0x9000, scoped, tag = 'internal scratch']
  %s0 = inlined_call_operand.hbm [shape: bf16[128,128], index: 0, kind: input, shape index: {}]
  %s1 = inlined_call_operand.hbm [shape: bf16[8,64], index: 1, kind: input, shape index: {}]
  %s2 = inlined_call_operand.hbm [shape: bf16[128,128], index: 2, kind: input, shape index: {}]
  %s3 = inlined_call_operand.vmem [shape: f32[1,128], index: 3, kind: input, shape index: {}]
  %s4 = inlined_call_operand.hbm [shape: bf16[128,128], index: 4, kind: input, shape index: {}]
  %s5 = inlined_call_operand.vmem [shape: f32[1,128], index: 5, kind: input, shape index: {}]
  %s6 = inlined_call_operand.hbm [shape: bf16[128,128], index: 6, kind: input, shape index: {}]
  %s7 = inlined_call_operand.vmem [shape: f32[1,128], index: 7, kind: input, shape index: {}]
  %s8 = inlined_call_operand.hbm [shape: bf16[128,128], index: 8, kind: input, shape index: {}]
  %s9 = inlined_call_operand.vmem [shape: f32[1,128], index: 9, kind: input, shape index: {}]
  %s10 = inlined_call_operand.hbm [shape: bf16[128,128], index: 10, kind: input, shape index: {}]
  %s11 = inlined_call_operand.vmem [shape: f32[1,128], index: 11, kind: input, shape index: {}]
  %s12 = inlined_call_operand.hbm [shape: bf16[128,128], index: 12, kind: input, shape index: {}]
  %s13 = inlined_call_operand.vmem [shape: f32[1,128], index: 13, kind: input, shape index: {}]
  %s14 = inlined_call_operand.hbm [shape: bf16[128,128], index: 14, kind: input, shape index: {}]
  %s15 = inlined_call_operand.vmem [shape: f32[1,128], index: 15, kind: input, shape index: {}]
  %s16 = inlined_call_operand.hbm [shape: bf16[128,128], index: 16, kind: input, shape index: {}]
  %s17 = inlined_call_operand.vmem [shape: f32[1,128], index: 17, kind: input, shape index: {}]
  %s18 = inlined_call_operand.hbm [shape: f32[16,128], index: 18, kind: output, shape index: {}]
  %s19 = sld [smem:[#allocation0]]
  $region145: #{tpu_custom_call.1} parent=0
    _
  %s21 = ssub.s32 1, %s19
  %s22 = scalar_select 0, %s21, %s19
  $region1: #{tpu_custom_call.1} parent=0
    #allocation2 [shape = 'u8[32768]{0}', space=vmem, size = 0x8000, scoped, tag = 'input window, operand 0']
    #allocation3 [shape = 's32[2]{0}', space=sflag, size = 0x8, scoped, tag = 'scoped memory for tpu_custom_call.1']
    #allocation4 [shape = 's32[2]{0}', space=sflag, size = 0x8, scoped, tag = 'scoped memory for tpu_custom_call.1']
    #allocation5 [shape = 'u8[2048]{0}', space=vmem, size = 0x800, scoped, tag = 'input window, operand 1, single buffered']
    #allocation6 [shape = 's32[1]{0}', space=sflag, size = 0x4, scoped, tag = 'scoped memory for tpu_custom_call.1']
    #allocation7 [shape = 'u8[32768]{0}', space=vmem, size = 0x8000, scoped, tag = 'input window, operand 2, single buffered']
    #allocation8 [shape = 'u8[32768]{0}', space=vmem, size = 0x8000, scoped, tag = 'input window, operand 4, single buffered']
    #allocation9 [shape = 's32[1]{0}', space=sflag, size = 0x4, scoped, tag = 'scoped memory for tpu_custom_call.1']
    #allocation10 [shape = 'u8[32768]{0}', space=vmem, size = 0x8000, scoped, tag = 'input window, operand 6, single buffered']
    #allocation11 [shape = 'u8[32768]{0}', space=vmem, size = 0x8000, scoped, tag = 'input window, operand 8, single buffered']
    #allocation12 [shape = 's32[1]{0}', space=sflag, size = 0x4, scoped, tag = 'scoped memory for tpu_custom_call.1']
    #allocation13 [shape = 'u8[32768]{0}', space=vmem, size = 0x8000, scoped, tag = 'input window, operand 10, single buffered']
    #allocation14 [shape = 'u8[32768]{0}', space=vmem, size = 0x8000, scoped, tag = 'input window, operand 12, single buffered']
    #allocation15 [shape = 's32[1]{0}', space=sflag, size = 0x4, scoped, tag = 'scoped memory for tpu_custom_call.1']
    #allocation16 [shape = 'u8[32768]{0}', space=vmem, size = 0x8000, scoped, tag = 'input window, operand 14, single buffered']
    #allocation17 [shape = 'u8[32768]{0}', space=vmem, size = 0x8000, scoped, tag = 'input window, operand 16, single buffered']
    #allocation18 [shape = 's32[1]{0}', space=sflag, size = 0x4, scoped, tag = 'scoped memory for tpu_custom_call.1']
    #allocation19 [shape = 'u8[8192]{0}', space=vmem, size = 0x2000, scoped, tag = 'output window, operand 0']
    %23 = vsyncpa [#allocation3], 0
    %s24 = scalar_lea.sflag [#allocation3], 1
    %25 = vsyncpa %s24, 0
    %26 = vsyncpa [#allocation6], 0
    %27 = vsyncpa [#allocation9], 0
    %28 = vsyncpa [#allocation12], 0
    %29 = vsyncpa [#allocation15], 0
    %30 = vsyncpa [#allocation18], 0
    %31 = vsyncpa [#allocation4], 0
    %s32 = scalar_lea.sflag [#allocation4], 1
    %33 = vsyncpa %s32, 0
    loop: start=0, step=1, limit=4
    $region2: #{tpu_custom_call.1} parent=1 // loop_pre_header
      _
    $region3: #{tpu_custom_call.1} parent=1 // loop_header
      %s35 = sphi 0, %s39
      %p36 = scmp.ge.s32.totalorder %s35, 4
      %s45 = sphi 0, %s47
      %s48 = sphi 0, %s45
      %s49 = sphi 0, %s48
      %s65 = sphi 0, %s49
      %s69 = sphi 0, %s69
      %s71 = sphi 0, %s69
      %s72 = sphi 0, %s71
      %s86 = sphi 0, %s72
      %s90 = sphi 0, %s90
      %s92 = sphi 0, %s90
      %s93 = sphi 0, %s92
      %s107 = sphi 0, %s93
      %s111 = sphi 0, %s111
      %s113 = sphi 0, %s111
      %s114 = sphi 0, %s113
      %s128 = sphi 0, %s114
      %s132 = sphi 0, %s132
      %s134 = sphi 0, %s132
      %s135 = sphi 0, %s134
      %s149 = sphi 0, %s135
      %s153 = sphi 0, %s153
      %s155 = sphi 0, %s153
      %s156 = sphi 0, %s155
      %s170 = sphi 0, %s156
      %s174 = sphi 0, %s174
      %s176 = sphi 0, %s174
      %s177 = sphi 0, %s176
      %s191 = sphi 0, %s177
      %s195 = sphi 0, %s195
      %s197 = sphi 0, %s195
      %s198 = sphi 0, %s197
      %s212 = sphi 0, %s198
      %s216 = sphi 0, %s216
      %s218 = sphi 0, %s216
      %s219 = sphi 0, %s218
      %s233 = sphi 0, %s219
      %s237 = sphi 0, %s237
      %s239 = sphi 0, %s237
      %s240 = sphi 0, %s239
      %s254 = sphi 0, %s240
      %s258 = sphi 0, %s258
      %s260 = sphi 0, %s258
      %s261 = sphi 0, %s260
      %s275 = sphi 0, %s261
      %s279 = sphi 0, %s279
      %s281 = sphi 0, %s279
      %s282 = sphi 0, %s281
      %s296 = sphi 0, %s282
      %s300 = sphi 0, %s300
      %s302 = sphi 0, %s300
      %s303 = sphi 0, %s302
      %s317 = sphi 0, %s303
      %s321 = sphi 0, %s321
      %s323 = sphi 0, %s321
      %s324 = sphi 0, %s323
      %s338 = sphi 0, %s324
      %s342 = sphi 0, %s342
      %s344 = sphi 0, %s342
      %s345 = sphi 0, %s344
      %s359 = sphi 0, %s345
      %s363 = sphi 0, %s363
      %s365 = sphi 0, %s363
      %s366 = sphi 0, %s365
      %s380 = sphi 0, %s366
      %s384 = sphi 0, %s384
      %s386 = sphi 0, %s384
      %s387 = sphi 0, %s386
      %s401 = sphi 0, %s387
      %s405 = sphi 0, %s405
      %s407 = sphi 0, %s405
      %s408 = sphi 0, %s407
      %s422 = sphi 0, %s408
      %s428 = sphi 0, %s430
      %s431 = sphi 0, %s428
      %s432 = sphi 0, %s431
      %s448 = sphi 0, %s432
    $region4: #{tpu_custom_call.1} parent=1 // loop_header_branch
      %38 = sbr.rel (%p36) target = $region8
    $region5: #{tpu_custom_call.1} parent=1 // loop_body
      %s40 = ssub.s32 %s35, 1
      %s41 = ssub.s32 %s35, 2
      %s42 = sadd.s32 %s35, 1
      %s43 = ssub.s32 %s35, %s42
      %p44 = scmp.eq.s32.totalorder %s43, 0
      %s46 = sadd.s32 %s45, 1
      %s47 = scalar_select %p44, %s45, %s46
      %p50 = pneg %p44
      %p51 = scmp.eq.s32.totalorder %s35, 1
      %p52 = por %p50, %p51
      %p53 = scmp.ne.s32.totalorder %s45, %s48
      %p54 = scmp.eq.s32.totalorder %s35, 0
      %p55 = por %p53, %p54
      %p56 = scmp.ne.s32.totalorder %s45, %s48
      %p57 = scmp.eq.s32.totalorder %s40, 1
      %p58 = por %p56, %p57
      %p59 = scmp.ne.s32.totalorder %s48, %s49
      %p60 = scmp.eq.s32.totalorder %s40, 0
      %p61 = por %p59, %p60
      %p62 = scmp.ne.s32.totalorder %s48, %s49
      %p63 = scmp.eq.s32.totalorder %s41, 1
      %p64 = por %p62, %p63
      %p66 = scmp.ne.s32.totalorder %s49, %s65
      %p67 = scmp.eq.s32.totalorder %s41, 0
      %p68 = por %p66, %p67
      %s70 = sadd.s32 %s69, 1
      %p73 = scmp.eq.s32.totalorder %s35, 1
      %p74 = scmp.ne.s32.totalorder %s69, %s71
      %p75 = scmp.eq.s32.totalorder %s35, 0
      %p76 = por %p74, %p75
      %p77 = scmp.ne.s32.totalorder %s69, %s71
      %p78 = scmp.eq.s32.totalorder %s40, 1
      %p79 = por %p77, %p78
      %p80 = scmp.ne.s32.totalorder %s71, %s72
      %p81 = scmp.eq.s32.totalorder %s40, 0
      %p82 = por %p80, %p81
      %p83 = scmp.ne.s32.totalorder %s71, %s72
      %p84 = scmp.eq.s32.totalorder %s41, 1
      %p85 = por %p83, %p84
      %p87 = scmp.ne.s32.totalorder %s72, %s86
      %p88 = scmp.eq.s32.totalorder %s41, 0
      %p89 = por %p87, %p88
      %s91 = sadd.s32 %s90, 1
      %p94 = scmp.eq.s32.totalorder %s35, 1
      %p95 = scmp.ne.s32.totalorder %s90, %s92
      %p96 = scmp.eq.s32.totalorder %s35, 0
      %p97 = por %p95, %p96
      %p98 = scmp.ne.s32.totalorder %s90, %s92
      %p99 = scmp.eq.s32.totalorder %s40, 1
      %p100 = por %p98, %p99
      %p101 = scmp.ne.s32.totalorder %s92, %s93
      %p102 = scmp.eq.s32.totalorder %s40, 0
      %p103 = por %p101, %p102
      %p104 = scmp.ne.s32.totalorder %s92, %s93
      %p105 = scmp.eq.s32.totalorder %s41, 1
      %p106 = por %p104, %p105
      %p108 = scmp.ne.s32.totalorder %s93, %s107
      %p109 = scmp.eq.s32.totalorder %s41, 0
      %p110 = por %p108, %p109
      %s112 = sadd.s32 %s111, 1
      %p115 = scmp.eq.s32.totalorder %s35, 1
      %p116 = scmp.ne.s32.totalorder %s111, %s113
      %p117 = scmp.eq.s32.totalorder %s35, 0
      %p118 = por %p116, %p117
      %p119 = scmp.ne.s32.totalorder %s111, %s113
      %p120 = scmp.eq.s32.totalorder %s40, 1
      %p121 = por %p119, %p120
      %p122 = scmp.ne.s32.totalorder %s113, %s114
      %p123 = scmp.eq.s32.totalorder %s40, 0
      %p124 = por %p122, %p123
      %p125 = scmp.ne.s32.totalorder %s113, %s114
      %p126 = scmp.eq.s32.totalorder %s41, 1
      %p127 = por %p125, %p126
      %p129 = scmp.ne.s32.totalorder %s114, %s128
      %p130 = scmp.eq.s32.totalorder %s41, 0
      %p131 = por %p129, %p130
      %s133 = sadd.s32 %s132, 1
      %p136 = scmp.eq.s32.totalorder %s35, 1
      %p137 = scmp.ne.s32.totalorder %s132, %s134
      %p138 = scmp.eq.s32.totalorder %s35, 0
      %p139 = por %p137, %p138
      %p140 = scmp.ne.s32.totalorder %s132, %s134
      %p141 = scmp.eq.s32.totalorder %s40, 1
      %p142 = por %p140, %p141
      %p143 = scmp.ne.s32.totalorder %s134, %s135
      %p144 = scmp.eq.s32.totalorder %s40, 0
      %p145 = por %p143, %p144
      %p146 = scmp.ne.s32.totalorder %s134, %s135
      %p147 = scmp.eq.s32.totalorder %s41, 1
      %p148 = por %p146, %p147
      %p150 = scmp.ne.s32.totalorder %s135, %s149
      %p151 = scmp.eq.s32.totalorder %s41, 0
      %p152 = por %p150, %p151
      %s154 = sadd.s32 %s153, 1
      %p157 = scmp.eq.s32.totalorder %s35, 1
      %p158 = scmp.ne.s32.totalorder %s153, %s155
      %p159 = scmp.eq.s32.totalorder %s35, 0
      %p160 = por %p158, %p159
      %p161 = scmp.ne.s32.totalorder %s153, %s155
      %p162 = scmp.eq.s32.totalorder %s40, 1
      %p163 = por %p161, %p162
      %p164 = scmp.ne.s32.totalorder %s155, %s156
      %p165 = scmp.eq.s32.totalorder %s40, 0
      %p166 = por %p164, %p165
      %p167 = scmp.ne.s32.totalorder %s155, %s156
      %p168 = scmp.eq.s32.totalorder %s41, 1
      %p169 = por %p167, %p168
      %p171 = scmp.ne.s32.totalorder %s156, %s170
      %p172 = scmp.eq.s32.totalorder %s41, 0
      %p173 = por %p171, %p172
      %s175 = sadd.s32 %s174, 1
      %p178 = scmp.eq.s32.totalorder %s35, 1
      %p179 = scmp.ne.s32.totalorder %s174, %s176
      %p180 = scmp.eq.s32.totalorder %s35, 0
      %p181 = por %p179, %p180
      %p182 = scmp.ne.s32.totalorder %s174, %s176
      %p183 = scmp.eq.s32.totalorder %s40, 1
      %p184 = por %p182, %p183
      %p185 = scmp.ne.s32.totalorder %s176, %s177
      %p186 = scmp.eq.s32.totalorder %s40, 0
      %p187 = por %p185, %p186
      %p188 = scmp.ne.s32.totalorder %s176, %s177
      %p189 = scmp.eq.s32.totalorder %s41, 1
      %p190 = por %p188, %p189
      %p192 = scmp.ne.s32.totalorder %s177, %s191
      %p193 = scmp.eq.s32.totalorder %s41, 0
      %p194 = por %p192, %p193
      %s196 = sadd.s32 %s195, 1
      %p199 = scmp.eq.s32.totalorder %s35, 1
      %p200 = scmp.ne.s32.totalorder %s195, %s197
      %p201 = scmp.eq.s32.totalorder %s35, 0
      %p202 = por %p200, %p201
      %p203 = scmp.ne.s32.totalorder %s195, %s197
      %p204 = scmp.eq.s32.totalorder %s40, 1
      %p205 = por %p203, %p204
      %p206 = scmp.ne.s32.totalorder %s197, %s198
      %p207 = scmp.eq.s32.totalorder %s40, 0
      %p208 = por %p206, %p207
      %p209 = scmp.ne.s32.totalorder %s197, %s198
      %p210 = scmp.eq.s32.totalorder %s41, 1
      %p211 = por %p209, %p210
      %p213 = scmp.ne.s32.totalorder %s198, %s212
      %p214 = scmp.eq.s32.totalorder %s41, 0
      %p215 = por %p213, %p214
      %s217 = sadd.s32 %s216, 1
      %p220 = scmp.eq.s32.totalorder %s35, 1
      %p221 = scmp.ne.s32.totalorder %s216, %s218
      %p222 = scmp.eq.s32.totalorder %s35, 0
      %p223 = por %p221, %p222
      %p224 = scmp.ne.s32.totalorder %s216, %s218
      %p225 = scmp.eq.s32.totalorder %s40, 1
      %p226 = por %p224, %p225
      %p227 = scmp.ne.s32.totalorder %s218, %s219
      %p228 = scmp.eq.s32.totalorder %s40, 0
      %p229 = por %p227, %p228
      %p230 = scmp.ne.s32.totalorder %s218, %s219
      %p231 = scmp.eq.s32.totalorder %s41, 1
      %p232 = por %p230, %p231
      %p234 = scmp.ne.s32.totalorder %s219, %s233
      %p235 = scmp.eq.s32.totalorder %s41, 0
      %p236 = por %p234, %p235
      %s238 = sadd.s32 %s237, 1
      %p241 = scmp.eq.s32.totalorder %s35, 1
      %p242 = scmp.ne.s32.totalorder %s237, %s239
      %p243 = scmp.eq.s32.totalorder %s35, 0
      %p244 = por %p242, %p243
      %p245 = scmp.ne.s32.totalorder %s237, %s239
      %p246 = scmp.eq.s32.totalorder %s40, 1
      %p247 = por %p245, %p246
      %p248 = scmp.ne.s32.totalorder %s239, %s240
      %p249 = scmp.eq.s32.totalorder %s40, 0
      %p250 = por %p248, %p249
      %p251 = scmp.ne.s32.totalorder %s239, %s240
      %p252 = scmp.eq.s32.totalorder %s41, 1
      %p253 = por %p251, %p252
      %p255 = scmp.ne.s32.totalorder %s240, %s254
      %p256 = scmp.eq.s32.totalorder %s41, 0
      %p257 = por %p255, %p256
      %s259 = sadd.s32 %s258, 1
      %p262 = scmp.eq.s32.totalorder %s35, 1
      %p263 = scmp.ne.s32.totalorder %s258, %s260
      %p264 = scmp.eq.s32.totalorder %s35, 0
      %p265 = por %p263, %p264
      %p266 = scmp.ne.s32.totalorder %s258, %s260
      %p267 = scmp.eq.s32.totalorder %s40, 1
      %p268 = por %p266, %p267
      %p269 = scmp.ne.s32.totalorder %s260, %s261
      %p270 = scmp.eq.s32.totalorder %s40, 0
      %p271 = por %p269, %p270
      %p272 = scmp.ne.s32.totalorder %s260, %s261
      %p273 = scmp.eq.s32.totalorder %s41, 1
      %p274 = por %p272, %p273
      %p276 = scmp.ne.s32.totalorder %s261, %s275
      %p277 = scmp.eq.s32.totalorder %s41, 0
      %p278 = por %p276, %p277
      %s280 = sadd.s32 %s279, 1
      %p283 = scmp.eq.s32.totalorder %s35, 1
      %p284 = scmp.ne.s32.totalorder %s279, %s281
      %p285 = scmp.eq.s32.totalorder %s35, 0
      %p286 = por %p284, %p285
      %p287 = scmp.ne.s32.totalorder %s279, %s281
      %p288 = scmp.eq.s32.totalorder %s40, 1
      %p289 = por %p287, %p288
      %p290 = scmp.ne.s32.totalorder %s281, %s282
      %p291 = scmp.eq.s32.totalorder %s40, 0
      %p292 = por %p290, %p291
      %p293 = scmp.ne.s32.totalorder %s281, %s282
      %p294 = scmp.eq.s32.totalorder %s41, 1
      %p295 = por %p293, %p294
      %p297 = scmp.ne.s32.totalorder %s282, %s296
      %p298 = scmp.eq.s32.totalorder %s41, 0
      %p299 = por %p297, %p298
      %s301 = sadd.s32 %s300, 1
      %p304 = scmp.eq.s32.totalorder %s35, 1
      %p305 = scmp.ne.s32.totalorder %s300, %s302
      %p306 = scmp.eq.s32.totalorder %s35, 0
      %p307 = por %p305, %p306
      %p308 = scmp.ne.s32.totalorder %s300, %s302
      %p309 = scmp.eq.s32.totalorder %s40, 1
      %p310 = por %p308, %p309
      %p311 = scmp.ne.s32.totalorder %s302, %s303
      %p312 = scmp.eq.s32.totalorder %s40, 0
      %p313 = por %p311, %p312
      %p314 = scmp.ne.s32.totalorder %s302, %s303
      %p315 = scmp.eq.s32.totalorder %s41, 1
      %p316 = por %p314, %p315
      %p318 = scmp.ne.s32.totalorder %s303, %s317
      %p319 = scmp.eq.s32.totalorder %s41, 0
      %p320 = por %p318, %p319
      %s322 = sadd.s32 %s321, 1
      %p325 = scmp.eq.s32.totalorder %s35, 1
      %p326 = scmp.ne.s32.totalorder %s321, %s323
      %p327 = scmp.eq.s32.totalorder %s35, 0
      %p328 = por %p326, %p327
      %p329 = scmp.ne.s32.totalorder %s321, %s323
      %p330 = scmp.eq.s32.totalorder %s40, 1
      %p331 = por %p329, %p330
      %p332 = scmp.ne.s32.totalorder %s323, %s324
      %p333 = scmp.eq.s32.totalorder %s40, 0
      %p334 = por %p332, %p333
      %p335 = scmp.ne.s32.totalorder %s323, %s324
      %p336 = scmp.eq.s32.totalorder %s41, 1
      %p337 = por %p335, %p336
      %p339 = scmp.ne.s32.totalorder %s324, %s338
      %p340 = scmp.eq.s32.totalorder %s41, 0
      %p341 = por %p339, %p340
      %s343 = sadd.s32 %s342, 1
      %p346 = scmp.eq.s32.totalorder %s35, 1
      %p347 = scmp.ne.s32.totalorder %s342, %s344
      %p348 = scmp.eq.s32.totalorder %s35, 0
      %p349 = por %p347, %p348
      %p350 = scmp.ne.s32.totalorder %s342, %s344
      %p351 = scmp.eq.s32.totalorder %s40, 1
      %p352 = por %p350, %p351
      %p353 = scmp.ne.s32.totalorder %s344, %s345
      %p354 = scmp.eq.s32.totalorder %s40, 0
      %p355 = por %p353, %p354
      %p356 = scmp.ne.s32.totalorder %s344, %s345
      %p357 = scmp.eq.s32.totalorder %s41, 1
      %p358 = por %p356, %p357
      %p360 = scmp.ne.s32.totalorder %s345, %s359
      %p361 = scmp.eq.s32.totalorder %s41, 0
      %p362 = por %p360, %p361
      %s364 = sadd.s32 %s363, 1
      %p367 = scmp.eq.s32.totalorder %s35, 1
      %p368 = scmp.ne.s32.totalorder %s363, %s365
      %p369 = scmp.eq.s32.totalorder %s35, 0
      %p370 = por %p368, %p369
      %p371 = scmp.ne.s32.totalorder %s363, %s365
      %p372 = scmp.eq.s32.totalorder %s40, 1
      %p373 = por %p371, %p372
      %p374 = scmp.ne.s32.totalorder %s365, %s366
      %p375 = scmp.eq.s32.totalorder %s40, 0
      %p376 = por %p374, %p375
      %p377 = scmp.ne.s32.totalorder %s365, %s366
      %p378 = scmp.eq.s32.totalorder %s41, 1
      %p379 = por %p377, %p378
      %p381 = scmp.ne.s32.totalorder %s366, %s380
      %p382 = scmp.eq.s32.totalorder %s41, 0
      %p383 = por %p381, %p382
      %s385 = sadd.s32 %s384, 1
      %p388 = scmp.eq.s32.totalorder %s35, 1
      %p389 = scmp.ne.s32.totalorder %s384, %s386
      %p390 = scmp.eq.s32.totalorder %s35, 0
      %p391 = por %p389, %p390
      %p392 = scmp.ne.s32.totalorder %s384, %s386
      %p393 = scmp.eq.s32.totalorder %s40, 1
      %p394 = por %p392, %p393
      %p395 = scmp.ne.s32.totalorder %s386, %s387
      %p396 = scmp.eq.s32.totalorder %s40, 0
      %p397 = por %p395, %p396
      %p398 = scmp.ne.s32.totalorder %s386, %s387
      %p399 = scmp.eq.s32.totalorder %s41, 1
      %p400 = por %p398, %p399
      %p402 = scmp.ne.s32.totalorder %s387, %s401
      %p403 = scmp.eq.s32.totalorder %s41, 0
      %p404 = por %p402, %p403
      %s406 = sadd.s32 %s405, 1
      %p409 = scmp.eq.s32.totalorder %s35, 1
      %p410 = scmp.ne.s32.totalorder %s405, %s407
      %p411 = scmp.eq.s32.totalorder %s35, 0
      %p412 = por %p410, %p411
      %p413 = scmp.ne.s32.totalorder %s405, %s407
      %p414 = scmp.eq.s32.totalorder %s40, 1
      %p415 = por %p413, %p414
      %p416 = scmp.ne.s32.totalorder %s407, %s408
      %p417 = scmp.eq.s32.totalorder %s40, 0
      %p418 = por %p416, %p417
      %p419 = scmp.ne.s32.totalorder %s407, %s408
      %p420 = scmp.eq.s32.totalorder %s41, 1
      %p421 = por %p419, %p420
      %p423 = scmp.ne.s32.totalorder %s408, %s422
      %p424 = scmp.eq.s32.totalorder %s41, 0
      %p425 = por %p423, %p424
      %s426 = ssub.s32 %s35, %s42
      %p427 = scmp.eq.s32.totalorder %s426, 0
      %s429 = sadd.s32 %s428, 1
      %s430 = scalar_select %p427, %s428, %s429
      %p433 = pneg %p427
      %p434 = scmp.eq.s32.totalorder %s35, 1
      %p435 = por %p433, %p434
      %p436 = scmp.ne.s32.totalorder %s428, %s431
      %p437 = scmp.eq.s32.totalorder %s35, 0
      %p438 = por %p436, %p437
      %p439 = scmp.ne.s32.totalorder %s428, %s431
      %p440 = scmp.eq.s32.totalorder %s40, 1
      %p441 = por %p439, %p440
      %p442 = scmp.ne.s32.totalorder %s431, %s432
      %p443 = scmp.eq.s32.totalorder %s40, 0
      %p444 = por %p442, %p443
      %p445 = scmp.ne.s32.totalorder %s431, %s432
      %p446 = scmp.eq.s32.totalorder %s41, 1
      %p447 = por %p445, %p446
      %p449 = scmp.ne.s32.totalorder %s432, %s448
      %p450 = scmp.eq.s32.totalorder %s41, 0
      %p451 = por %p449, %p450
      %p452 = scmp.le.s32.totalorder 1, %s35
      %p453 = scmp.lt.s32.totalorder %s35, 3
      %p454 = pnand %p452, %p453
      %p455 = pneg %p454
      // Predicated region
      $region9: #{tpu_custom_call.1} parent=5 // pred_check
        _
      $region10: #{tpu_custom_call.1} parent=5 // pred_check_branch
        %457 = sbr.rel (%p454) target = $region12
      $region11: #{tpu_custom_call.1} parent=5 // pred_region
        %s458 = ssub.s32 %s35, 1
        // Predicated region
        $region13: #{tpu_custom_call.1} parent=11 // pred_check
          %p459 = pneg %p82
        $region14: #{tpu_custom_call.1} parent=11 // pred_check_branch
          %461 = sbr.rel (%p459) target = $region16
        $region15: #{tpu_custom_call.1} parent=11 // pred_region
          %463 = vsyncadd [#allocation6], 0
          %s465 = sshll.u32 %s1, 4
          %s466 = int_to_ptr.hbm [resolvable:$true] %s465
          %s467 = sshll.u32 [#allocation5], 4
          %s468 = int_to_ptr.vmem [resolvable:$true] %s467
          %470 = dma.hbm_to_vmem [thread:$0]  %s466, 64, %s468, [#allocation6]
        $region16: #{tpu_custom_call.1} parent=11 // pred_fallthru
          _
        // Predicated region
        $region17: #{tpu_custom_call.1} parent=11 // pred_check
          %p471 = pneg %p103
        $region18: #{tpu_custom_call.1} parent=11 // pred_check_branch
          %473 = sbr.rel (%p471) target = $region20
        $region19: #{tpu_custom_call.1} parent=11 // pred_region
          %475 = vsyncadd [#allocation6], 0
          %s476 = sshll.u32 %s2, 4
          %s477 = int_to_ptr.hbm [resolvable:$true] %s476
          %s478 = sshll.u32 [#allocation7], 4
          %s479 = int_to_ptr.vmem [resolvable:$true] %s478
          %484 = dma.hbm_to_vmem [thread:$0]  %s477, 1024, %s479, [#allocation6], 64, 64, 4
        $region20: #{tpu_custom_call.1} parent=11 // pred_fallthru
          _
        // Predicated region
        $region21: #{tpu_custom_call.1} parent=11 // pred_check
          %p485 = pneg %p124
        $region22: #{tpu_custom_call.1} parent=11 // pred_check_branch
          %487 = sbr.rel (%p485) target = $region24
        $region23: #{tpu_custom_call.1} parent=11 // pred_region
          _
        $region24: #{tpu_custom_call.1} parent=11 // pred_fallthru
          _
        // Predicated region
        $region25: #{tpu_custom_call.1} parent=11 // pred_check
          %p488 = pneg %p145
        $region26: #{tpu_custom_call.1} parent=11 // pred_check_branch
          %490 = sbr.rel (%p488) target = $region28
        $region27: #{tpu_custom_call.1} parent=11 // pred_region
          %492 = vsyncadd [#allocation9], 0
          %s493 = sshll.u32 %s4, 4
          %s494 = int_to_ptr.hbm [resolvable:$true] %s493
          %s495 = sshll.u32 [#allocation8], 4
          %s496 = int_to_ptr.vmem [resolvable:$true] %s495
          %501 = dma.hbm_to_vmem [thread:$0]  %s494, 1024, %s496, [#allocation9], 64, 64, 4
        $region28: #{tpu_custom_call.1} parent=11 // pred_fallthru
          _
        // Predicated region
        $region29: #{tpu_custom_call.1} parent=11 // pred_check
          %p502 = pneg %p166
        $region30: #{tpu_custom_call.1} parent=11 // pred_check_branch
          %504 = sbr.rel (%p502) target = $region32
        $region31: #{tpu_custom_call.1} parent=11 // pred_region
          _
        $region32: #{tpu_custom_call.1} parent=11 // pred_fallthru
          _
        // Predicated region
        $region33: #{tpu_custom_call.1} parent=11 // pred_check
          %p505 = pneg %p187
        $region34: #{tpu_custom_call.1} parent=11 // pred_check_branch
          %507 = sbr.rel (%p505) target = $region36
        $region35: #{tpu_custom_call.1} parent=11 // pred_region
          %509 = vsyncadd [#allocation9], 0
          %s510 = sshll.u32 %s6, 4
          %s511 = int_to_ptr.hbm [resolvable:$true] %s510
          %s512 = sshll.u32 [#allocation10], 4
          %s513 = int_to_ptr.vmem [resolvable:$true] %s512
          %518 = dma.hbm_to_vmem [thread:$0]  %s511, 1024, %s513, [#allocation9], 64, 64, 4
        $region36: #{tpu_custom_call.1} parent=11 // pred_fallthru
          _
        // Predicated region
        $region37: #{tpu_custom_call.1} parent=11 // pred_check
          %p519 = pneg %p208
        $region38: #{tpu_custom_call.1} parent=11 // pred_check_branch
          %521 = sbr.rel (%p519) target = $region40
        $region39: #{tpu_custom_call.1} parent=11 // pred_region
          _
        $region40: #{tpu_custom_call.1} parent=11 // pred_fallthru
          _
        // Predicated region
        $region41: #{tpu_custom_call.1} parent=11 // pred_check
          %p522 = pneg %p229
        $region42: #{tpu_custom_call.1} parent=11 // pred_check_branch
          %524 = sbr.rel (%p522) target = $region44
        $region43: #{tpu_custom_call.1} parent=11 // pred_region
          %526 = vsyncadd [#allocation12], 0
          %s527 = sshll.u32 %s8, 4
          %s528 = int_to_ptr.hbm [resolvable:$true] %s527
          %s529 = sshll.u32 [#allocation11], 4
          %s530 = int_to_ptr.vmem [resolvable:$true] %s529
          %535 = dma.hbm_to_vmem [thread:$0]  %s528, 1024, %s530, [#allocation12], 64, 64, 4
        $region44: #{tpu_custom_call.1} parent=11 // pred_fallthru
          _
        // Predicated region
        $region45: #{tpu_custom_call.1} parent=11 // pred_check
          %p536 = pneg %p250
        $region46: #{tpu_custom_call.1} parent=11 // pred_check_branch
          %538 = sbr.rel (%p536) target = $region48
        $region47: #{tpu_custom_call.1} parent=11 // pred_region
          _
        $region48: #{tpu_custom_call.1} parent=11 // pred_fallthru
          _
        // Predicated region
        $region49: #{tpu_custom_call.1} parent=11 // pred_check
          %p539 = pneg %p271
        $region50: #{tpu_custom_call.1} parent=11 // pred_check_branch
          %541 = sbr.rel (%p539) target = $region52
        $region51: #{tpu_custom_call.1} parent=11 // pred_region
          %543 = vsyncadd [#allocation12], 0
          %s544 = sshll.u32 %s10, 4
          %s545 = int_to_ptr.hbm [resolvable:$true] %s544
          %s546 = sshll.u32 [#allocation13], 4
          %s547 = int_to_ptr.vmem [resolvable:$true] %s546
          %552 = dma.hbm_to_vmem [thread:$0]  %s545, 1024, %s547, [#allocation12], 64, 64, 4
        $region52: #{tpu_custom_call.1} parent=11 // pred_fallthru
          _
        // Predicated region
        $region53: #{tpu_custom_call.1} parent=11 // pred_check
          %p553 = pneg %p292
        $region54: #{tpu_custom_call.1} parent=11 // pred_check_branch
          %555 = sbr.rel (%p553) target = $region56
        $region55: #{tpu_custom_call.1} parent=11 // pred_region
          _
        $region56: #{tpu_custom_call.1} parent=11 // pred_fallthru
          _
        // Predicated region
        $region57: #{tpu_custom_call.1} parent=11 // pred_check
          %p556 = pneg %p313
        $region58: #{tpu_custom_call.1} parent=11 // pred_check_branch
          %558 = sbr.rel (%p556) target = $region60
        $region59: #{tpu_custom_call.1} parent=11 // pred_region
          %560 = vsyncadd [#allocation15], 0
          %s561 = sshll.u32 %s12, 4
          %s562 = int_to_ptr.hbm [resolvable:$true] %s561
          %s563 = sshll.u32 [#allocation14], 4
          %s564 = int_to_ptr.vmem [resolvable:$true] %s563
          %569 = dma.hbm_to_vmem [thread:$0]  %s562, 1024, %s564, [#allocation15], 64, 64, 4
        $region60: #{tpu_custom_call.1} parent=11 // pred_fallthru
          _
        // Predicated region
        $region61: #{tpu_custom_call.1} parent=11 // pred_check
          %p570 = pneg %p334
        $region62: #{tpu_custom_call.1} parent=11 // pred_check_branch
          %572 = sbr.rel (%p570) target = $region64
        $region63: #{tpu_custom_call.1} parent=11 // pred_region
          _
        $region64: #{tpu_custom_call.1} parent=11 // pred_fallthru
          _
        // Predicated region
        $region65: #{tpu_custom_call.1} parent=11 // pred_check
          %p573 = pneg %p355
        $region66: #{tpu_custom_call.1} parent=11 // pred_check_branch
          %575 = sbr.rel (%p573) target = $region68
        $region67: #{tpu_custom_call.1} parent=11 // pred_region
          %577 = vsyncadd [#allocation15], 0
          %s578 = sshll.u32 %s14, 4
          %s579 = int_to_ptr.hbm [resolvable:$true] %s578
          %s580 = sshll.u32 [#allocation16], 4
          %s581 = int_to_ptr.vmem [resolvable:$true] %s580
          %586 = dma.hbm_to_vmem [thread:$0]  %s579, 1024, %s581, [#allocation15], 64, 64, 4
        $region68: #{tpu_custom_call.1} parent=11 // pred_fallthru
          _
        // Predicated region
        $region69: #{tpu_custom_call.1} parent=11 // pred_check
          %p587 = pneg %p376
        $region70: #{tpu_custom_call.1} parent=11 // pred_check_branch
          %589 = sbr.rel (%p587) target = $region72
        $region71: #{tpu_custom_call.1} parent=11 // pred_region
          _
        $region72: #{tpu_custom_call.1} parent=11 // pred_fallthru
          _
        // Predicated region
        $region73: #{tpu_custom_call.1} parent=11 // pred_check
          %p590 = pneg %p397
        $region74: #{tpu_custom_call.1} parent=11 // pred_check_branch
          %592 = sbr.rel (%p590) target = $region76
        $region75: #{tpu_custom_call.1} parent=11 // pred_region
          %594 = vsyncadd [#allocation18], 0
          %s595 = sshll.u32 %s16, 4
          %s596 = int_to_ptr.hbm [resolvable:$true] %s595
          %s597 = sshll.u32 [#allocation17], 4
          %s598 = int_to_ptr.vmem [resolvable:$true] %s597
          %603 = dma.hbm_to_vmem [thread:$0]  %s596, 1024, %s598, [#allocation18], 64, 64, 4
        $region76: #{tpu_custom_call.1} parent=11 // pred_fallthru
          _
        // Predicated region
        $region77: #{tpu_custom_call.1} parent=11 // pred_check
          %p604 = pneg %p418
        $region78: #{tpu_custom_call.1} parent=11 // pred_check_branch
          %606 = sbr.rel (%p604) target = $region80
        $region79: #{tpu_custom_call.1} parent=11 // pred_region
          _
        $region80: #{tpu_custom_call.1} parent=11 // pred_fallthru
          _
      $region12: #{tpu_custom_call.1} parent=5 // pred_fallthru
        _
      %p607 = scmp.lt.s32.totalorder %s35, 2
      // Predicated region
      $region81: #{tpu_custom_call.1} parent=5 // pred_check
        %p608 = pneg %p607
      $region82: #{tpu_custom_call.1} parent=5 // pred_check_branch
        %610 = sbr.rel (%p608) target = $region84
      $region83: #{tpu_custom_call.1} parent=5 // pred_region
        // Predicated region
        $region85: #{tpu_custom_call.1} parent=83 // pred_check
          %p611 = pneg %p55
        $region86: #{tpu_custom_call.1} parent=83 // pred_check_branch
          %613 = sbr.rel (%p611) target = $region88
        $region87: #{tpu_custom_call.1} parent=83 // pred_region
          %s614 = sand.u32 %s45, 1
          %s615 = scalar_lea.sflag [#allocation3], %s614
          %s616 = sand.u32 %s45, 1
          %s617 = smul.addr %s616, 32
          %s618 = scalar_lea.vmem [#allocation2], %s617
          %s619 = smul.u32 8, %s35
          %621 = vsyncadd %s615, 0
          %s622 = smul.addr %s619, 4
          %s623 = scalar_lea.hbm %s0, %s622
          %s624 = sshll.u32 %s623, 4
          %s625 = int_to_ptr.hbm [resolvable:$true] %s624
          %s626 = sshll.u32 %s618, 4
          %s627 = int_to_ptr.vmem [resolvable:$true] %s626
          %632 = dma.hbm_to_vmem [thread:$0]  %s625, 512, %s627, %s615, 64, 64, 4
        $region88: #{tpu_custom_call.1} parent=83 // pred_fallthru
          _
      $region84: #{tpu_custom_call.1} parent=5 // pred_fallthru
        _
      %p633 = scmp.le.s32.totalorder 1, %s35
      %p634 = scmp.lt.s32.totalorder %s35, 3
      %p635 = pnand %p633, %p634
      %p636 = pneg %p635
      // Predicated region
      $region89: #{tpu_custom_call.1} parent=5 // pred_check
        _
      $region90: #{tpu_custom_call.1} parent=5 // pred_check_branch
        %638 = sbr.rel (%p635) target = $region92
      $region91: #{tpu_custom_call.1} parent=5 // pred_region
        %s639 = ssub.s32 %s35, 1
        %s640 = sand.u32 %s48, 1
        %s641 = scalar_lea.sflag [#allocation3], %s640
        %s642 = sand.u32 %s48, 1
        %s643 = smul.addr %s642, 32
        %s644 = scalar_lea.vmem [#allocation2], %s643
        // Predicated region
        $region93: #{tpu_custom_call.1} parent=91 // pred_check
          %p645 = pneg %p61
        $region94: #{tpu_custom_call.1} parent=91 // pred_check_branch
          %647 = sbr.rel (%p645) target = $region96
        $region95: #{tpu_custom_call.1} parent=91 // pred_region
          %649 = dma.done %s641, 512
        $region96: #{tpu_custom_call.1} parent=91 // pred_fallthru
          _
        // Predicated region
        $region97: #{tpu_custom_call.1} parent=91 // pred_check
          %p650 = pneg %p82
        $region98: #{tpu_custom_call.1} parent=91 // pred_check_branch
          %652 = sbr.rel (%p650) target = $region100
        $region99: #{tpu_custom_call.1} parent=91 // pred_region
          %654 = dma.done [#allocation6], 64
        $region100: #{tpu_custom_call.1} parent=91 // pred_fallthru
          _
        // Predicated region
        $region101: #{tpu_custom_call.1} parent=91 // pred_check
          %p655 = pneg %p103
        $region102: #{tpu_custom_call.1} parent=91 // pred_check_branch
          %657 = sbr.rel (%p655) target = $region104
        $region103: #{tpu_custom_call.1} parent=91 // pred_region
          %659 = dma.done [#allocation6], 1024
        $region104: #{tpu_custom_call.1} parent=91 // pred_fallthru
          _
        // Predicated region
        $region105: #{tpu_custom_call.1} parent=91 // pred_check
          %p660 = pneg %p145
        $region106: #{tpu_custom_call.1} parent=91 // pred_check_branch
          %662 = sbr.rel (%p660) target = $region108
        $region107: #{tpu_custom_call.1} parent=91 // pred_region
          %664 = dma.done [#allocation9], 1024
        $region108: #{tpu_custom_call.1} parent=91 // pred_fallthru
          _
        // Predicated region
        $region109: #{tpu_custom_call.1} parent=91 // pred_check
          %p665 = pneg %p187
        $region110: #{tpu_custom_call.1} parent=91 // pred_check_branch
          %667 = sbr.rel (%p665) target = $region112
        $region111: #{tpu_custom_call.1} parent=91 // pred_region
          %669 = dma.done [#allocation9], 1024
        $region112: #{tpu_custom_call.1} parent=91 // pred_fallthru
          _
        // Predicated region
        $region113: #{tpu_custom_call.1} parent=91 // pred_check
          %p670 = pneg %p229
        $region114: #{tpu_custom_call.1} parent=91 // pred_check_branch
          %672 = sbr.rel (%p670) target = $region116
        $region115: #{tpu_custom_call.1} parent=91 // pred_region
          %674 = dma.done [#allocation12], 1024
        $region116: #{tpu_custom_call.1} parent=91 // pred_fallthru
          _
        // Predicated region
        $region117: #{tpu_custom_call.1} parent=91 // pred_check
          %p675 = pneg %p271
        $region118: #{tpu_custom_call.1} parent=91 // pred_check_branch
          %677 = sbr.rel (%p675) target = $region120
        $region119: #{tpu_custom_call.1} parent=91 // pred_region
          %679 = dma.done [#allocation12], 1024
        $region120: #{tpu_custom_call.1} parent=91 // pred_fallthru
          _
        // Predicated region
        $region121: #{tpu_custom_call.1} parent=91 // pred_check
          %p680 = pneg %p313
        $region122: #{tpu_custom_call.1} parent=91 // pred_check_branch
          %682 = sbr.rel (%p680) target = $region124
        $region123: #{tpu_custom_call.1} parent=91 // pred_region
          %684 = dma.done [#allocation15], 1024
        $region124: #{tpu_custom_call.1} parent=91 // pred_fallthru
          _
        // Predicated region
        $region125: #{tpu_custom_call.1} parent=91 // pred_check
          %p685 = pneg %p355
        $region126: #{tpu_custom_call.1} parent=91 // pred_check_branch
          %687 = sbr.rel (%p685) target = $region128
        $region127: #{tpu_custom_call.1} parent=91 // pred_region
          %689 = dma.done [#allocation15], 1024
        $region128: #{tpu_custom_call.1} parent=91 // pred_fallthru
          _
        // Predicated region
        $region129: #{tpu_custom_call.1} parent=91 // pred_check
          %p690 = pneg %p397
        $region130: #{tpu_custom_call.1} parent=91 // pred_check_branch
          %692 = sbr.rel (%p690) target = $region132
        $region131: #{tpu_custom_call.1} parent=91 // pred_region
          %694 = dma.done [#allocation18], 1024
        $region132: #{tpu_custom_call.1} parent=91 // pred_fallthru
          _
        %s695 = sand.u32 %s48, 1
        %s696 = scalar_lea.sflag [#allocation3], %s695
        %s697 = sand.u32 %s48, 1
        %s698 = smul.addr %s697, 32
        %s699 = scalar_lea.vmem [#allocation2], %s698
        %p700 = pneg %p61
        %p701 = pneg %p58
        %p702 = pneg %p82
        %p703 = pneg %p79
        %p704 = pneg %p103
        %p705 = pneg %p100
        %p706 = pneg %p124
        %p707 = pneg %p121
        %p708 = pneg %p145
        %p709 = pneg %p142
        %p710 = pneg %p166
        %p711 = pneg %p163
        %p712 = pneg %p187
        %p713 = pneg %p184
        %p714 = pneg %p208
        %p715 = pneg %p205
        %p716 = pneg %p229
        %p717 = pneg %p226
        %p718 = pneg %p250
        %p719 = pneg %p247
        %p720 = pneg %p271
        %p721 = pneg %p268
        %p722 = pneg %p292
        %p723 = pneg %p289
        %p724 = pneg %p313
        %p725 = pneg %p310
        %p726 = pneg %p334
        %p727 = pneg %p331
        %p728 = pneg %p355
        %p729 = pneg %p352
        %p730 = pneg %p376
        %p731 = pneg %p373
        %p732 = pneg %p397
        %p733 = pneg %p394
        %p734 = pneg %p418
        %p735 = pneg %p415
        %p736 = pneg %p444
        %p737 = pneg %p441
        %s738 = sand.u32 %s431, 1
        %s739 = scalar_lea.sflag [#allocation4], %s738
        %s740 = sand.u32 %s431, 1
        %s741 = smul.addr %s740, 8
        %s742 = scalar_lea.vmem [#allocation19], %s741
        %s743 = smul.u32 8, %s40
        %v745 = vld [vmem:[%s644] sm:$0xf]
        %v746 = vld [vmem:[%s644 + $0x4] sm:$0xf]
        %v747 = vld [vmem:[%s644 + $0x8] sm:$0xf]
        %v748 = vld [vmem:[%s644 + $0xc] sm:$0xf]
        %v749 = vld [vmem:[%s644 + $0x10] sm:$0xf]
        %v750 = vld [vmem:[%s644 + $0x14] sm:$0xf]
        %v751 = vld [vmem:[%s644 + $0x18] sm:$0xf]
        %v752 = vld [vmem:[%s644 + $0x1c] sm:$0xf]
        %v753 = vld [vmem:[#allocation7] sm:$0xf]
        %v754 = vld [vmem:[#allocation7 + $0x4] sm:$0xf]
        %v755 = vld [vmem:[#allocation7 + $0x8] sm:$0xf]
        %v756 = vld [vmem:[#allocation7 + $0xc] sm:$0xf]
        %v757 = vld [vmem:[#allocation7 + $0x10] sm:$0xf]
        %v758 = vld [vmem:[#allocation7 + $0x14] sm:$0xf]
        %v759 = vld [vmem:[#allocation7 + $0x18] sm:$0xf]
        %v760 = vld [vmem:[#allocation7 + $0x1c] sm:$0xf]
        %v761 = vld [vmem:[#allocation7 + $0x20] sm:$0xf]
        %v762 = vld [vmem:[#allocation7 + $0x24] sm:$0xf]
        %v763 = vld [vmem:[#allocation7 + $0x28] sm:$0xf]
        %v764 = vld [vmem:[#allocation7 + $0x2c] sm:$0xf]
        %v765 = vld [vmem:[#allocation7 + $0x30] sm:$0xf]
        %v766 = vld [vmem:[#allocation7 + $0x34] sm:$0xf]
        %v767 = vld [vmem:[#allocation7 + $0x38] sm:$0xf]
        %v768 = vld [vmem:[#allocation7 + $0x3c] sm:$0xf]
        %v769 = vld [vmem:[%s3] sm:$0x1]
        %v771 = vperm.slane %v769, 0
        %v781 = vunpack.c.l.b16 %v745
        %v782 = vunpack.c.l.b16 %v746
        %v783 = vunpack.c.l.b16 %v747
        %v784 = vunpack.c.l.b16 %v748
        %v785 = vunpack.c.l.b16 %v749
        %v786 = vunpack.c.l.b16 %v750
        %v787 = vunpack.c.l.b16 %v751
        %v788 = vunpack.c.l.b16 %v752
        %v789 = vpack.c.b16 %v782, %v781
        %v790 = vpack.c.b16 %v784, %v783
        %v791 = vpack.c.b16 %v786, %v785
        %v792 = vpack.c.b16 %v788, %v787
        %v813 = vunpack.c.l.b16 %v753
        %v814 = vunpack.c.l.b16 %v754
        %v815 = vunpack.c.l.b16 %v755
        %v816 = vunpack.c.l.b16 %v756
        %v817 = vunpack.c.l.b16 %v757
        %v818 = vunpack.c.l.b16 %v758
        %v819 = vunpack.c.l.b16 %v759
        %v820 = vunpack.c.l.b16 %v760
        %v821 = vunpack.c.l.b16 %v761
        %v822 = vunpack.c.l.b16 %v762
        %v823 = vunpack.c.l.b16 %v763
        %v824 = vunpack.c.l.b16 %v764
        %v825 = vunpack.c.l.b16 %v765
        %v826 = vunpack.c.l.b16 %v766
        %v827 = vunpack.c.l.b16 %v767
        %v828 = vunpack.c.l.b16 %v768
        %v829 = vpack.c.b16 %v814, %v813
        %v830 = vpack.c.b16 %v816, %v815
        %v831 = vpack.c.b16 %v818, %v817
        %v832 = vpack.c.b16 %v820, %v819
        %v833 = vpack.c.b16 %v822, %v821
        %v834 = vpack.c.b16 %v824, %v823
        %v835 = vpack.c.b16 %v826, %v825
        %v836 = vpack.c.b16 %v828, %v827
        %845 = vmatpush.bf16.msra.mxu0 %v836
        %846 = vmatpush.bf16.msra.mxu0 %v835
        %847 = vmatpush.bf16.msra.mxu0 %v834
        %848 = vmatpush.bf16.msra.mxu0 %v833
        %849 = vmatpush.bf16.msra.mxu0 %v832
        %850 = vmatpush.bf16.msra.mxu0 %v831
        %851 = vmatpush.bf16.msra.mxu0 %v830
        %852 = vmatpush.bf16.msra.mxu0 %v829
        %853 = vmatmul.bf16.gmra.mxu0 %v789
        %v854 = vpop.f32.mrf.mxu0
        %v855 = vadd.f32 %v771, %v854
        %v856 = vpop.f32.mrf.mxu0
        %v857 = vadd.f32 %v771, %v856
        %858 = vmatmul.bf16.gmra.mxu0 %v790
        %v859 = vpop.f32.mrf.mxu0
        %v860 = vadd.f32 %v771, %v859
        %v861 = vpop.f32.mrf.mxu0
        %v862 = vadd.f32 %v771, %v861
        %863 = vmatmul.bf16.gmra.mxu0 %v791
        %v864 = vpop.f32.mrf.mxu0
        %v865 = vadd.f32 %v771, %v864
        %v866 = vpop.f32.mrf.mxu0
        %v867 = vadd.f32 %v771, %v866
        %868 = vmatmul.bf16.gmra.mxu0 %v792
        %v869 = vpop.f32.mrf.mxu0
        %v870 = vadd.f32 %v771, %v869
        %v871 = vpop.f32.mrf.mxu0
        %v872 = vadd.f32 %v771, %v871
        %873 = vdwg.mxu0
        %v874 = vmax.f32 %v855, 0.0
        %v875 = vmax.f32 %v857, 0.0
        %v876 = vmax.f32 %v860, 0.0
        %v877 = vmax.f32 %v862, 0.0
        %v878 = vmax.f32 %v865, 0.0
        %v879 = vmax.f32 %v867, 0.0
        %v880 = vmax.f32 %v870, 0.0
        %v881 = vmax.f32 %v872, 0.0
        %v882 = vpack.c.bf16 %v875, %v874
        %v883 = vpack.c.bf16 %v877, %v876
        %v884 = vpack.c.bf16 %v879, %v878
        %v885 = vpack.c.bf16 %v881, %v880
        %v886 = vld [vmem:[#allocation8] sm:$0xf]
        %v887 = vld [vmem:[#allocation8 + $0x4] sm:$0xf]
        %v888 = vld [vmem:[#allocation8 + $0x8] sm:$0xf]
        %v889 = vld [vmem:[#allocation8 + $0xc] sm:$0xf]
        %v890 = vld [vmem:[#allocation8 + $0x10] sm:$0xf]
        %v891 = vld [vmem:[#allocation8 + $0x14] sm:$0xf]
        %v892 = vld [vmem:[#allocation8 + $0x18] sm:$0xf]
        %v893 = vld [vmem:[#allocation8 + $0x1c] sm:$0xf]
        %v894 = vld [vmem:[#allocation8 + $0x20] sm:$0xf]
        %v895 = vld [vmem:[#allocation8 + $0x24] sm:$0xf]
        %v896 = vld [vmem:[#allocation8 + $0x28] sm:$0xf]
        %v897 = vld [vmem:[#allocation8 + $0x2c] sm:$0xf]
        %v898 = vld [vmem:[#allocation8 + $0x30] sm:$0xf]
        %v899 = vld [vmem:[#allocation8 + $0x34] sm:$0xf]
        %v900 = vld [vmem:[#allocation8 + $0x38] sm:$0xf]
        %v901 = vld [vmem:[#allocation8 + $0x3c] sm:$0xf]
        %v902 = vld [vmem:[%s5] sm:$0x1]
        %v904 = vperm.slane %v902, 0
        %v922 = vunpack.c.l.b16 %v886
        %v923 = vunpack.c.l.b16 %v887
        %v924 = vunpack.c.l.b16 %v888
        %v925 = vunpack.c.l.b16 %v889
        %v926 = vunpack.c.l.b16 %v890
        %v927 = vunpack.c.l.b16 %v891
        %v928 = vunpack.c.l.b16 %v892
        %v929 = vunpack.c.l.b16 %v893
        %v930 = vunpack.c.l.b16 %v894
        %v931 = vunpack.c.l.b16 %v895
        %v932 = vunpack.c.l.b16 %v896
        %v933 = vunpack.c.l.b16 %v897
        %v934 = vunpack.c.l.b16 %v898
        %v935 = vunpack.c.l.b16 %v899
        %v936 = vunpack.c.l.b16 %v900
        %v937 = vunpack.c.l.b16 %v901
        %v938 = vpack.c.b16 %v923, %v922
        %v939 = vpack.c.b16 %v925, %v924
        %v940 = vpack.c.b16 %v927, %v926
        %v941 = vpack.c.b16 %v929, %v928
        %v942 = vpack.c.b16 %v931, %v930
        %v943 = vpack.c.b16 %v933, %v932
        %v944 = vpack.c.b16 %v935, %v934
        %v945 = vpack.c.b16 %v937, %v936
        %954 = vmatpush.bf16.msra.mxu0 %v945
        %955 = vmatpush.bf16.msra.mxu0 %v944
        %956 = vmatpush.bf16.msra.mxu0 %v943
        %957 = vmatpush.bf16.msra.mxu0 %v942
        %958 = vmatpush.bf16.msra.mxu0 %v941
        %959 = vmatpush.bf16.msra.mxu0 %v940
        %960 = vmatpush.bf16.msra.mxu0 %v939
        %961 = vmatpush.bf16.msra.mxu0 %v938
        %962 = vmatmul.bf16.gmra.mxu0 %v882
        %v963 = vpop.f32.mrf.mxu0
        %v964 = vadd.f32 %v904, %v963
        %v965 = vpop.f32.mrf.mxu0
        %v966 = vadd.f32 %v904, %v965
        %967 = vmatmul.bf16.gmra.mxu0 %v883
        %v968 = vpop.f32.mrf.mxu0
        %v969 = vadd.f32 %v904, %v968
        %v970 = vpop.f32.mrf.mxu0
        %v971 = vadd.f32 %v904, %v970
        %972 = vmatmul.bf16.gmra.mxu0 %v884
        %v973 = vpop.f32.mrf.mxu0
        %v974 = vadd.f32 %v904, %v973
        %v975 = vpop.f32.mrf.mxu0
        %v976 = vadd.f32 %v904, %v975
        %977 = vmatmul.bf16.gmra.mxu0 %v885
        %v978 = vpop.f32.mrf.mxu0
        %v979 = vadd.f32 %v904, %v978
        %v980 = vpop.f32.mrf.mxu0
        %v981 = vadd.f32 %v904, %v980
        %982 = vdwg.mxu0
        %v983 = vmax.f32 %v964, 0.0
        %v984 = vmax.f32 %v966, 0.0
        %v985 = vmax.f32 %v969, 0.0
        %v986 = vmax.f32 %v971, 0.0
        %v987 = vmax.f32 %v974, 0.0
        %v988 = vmax.f32 %v976, 0.0
        %v989 = vmax.f32 %v979, 0.0
        %v990 = vmax.f32 %v981, 0.0
        %v991 = vpack.c.bf16 %v984, %v983
        %v992 = vpack.c.bf16 %v986, %v985
        %v993 = vpack.c.bf16 %v988, %v987
        %v994 = vpack.c.bf16 %v990, %v989
        %v995 = vld [vmem:[#allocation10] sm:$0xf]
        %v996 = vld [vmem:[#allocation10 + $0x4] sm:$0xf]
        %v997 = vld [vmem:[#allocation10 + $0x8] sm:$0xf]
        %v998 = vld [vmem:[#allocation10 + $0xc] sm:$0xf]
        %v999 = vld [vmem:[#allocation10 + $0x10] sm:$0xf]
        %v1000 = vld [vmem:[#allocation10 + $0x14] sm:$0xf]
        %v1001 = vld [vmem:[#allocation10 + $0x18] sm:$0xf]
        %v1002 = vld [vmem:[#allocation10 + $0x1c] sm:$0xf]
        %v1003 = vld [vmem:[#allocation10 + $0x20] sm:$0xf]
        %v1004 = vld [vmem:[#allocation10 + $0x24] sm:$0xf]
        %v1005 = vld [vmem:[#allocation10 + $0x28] sm:$0xf]
        %v1006 = vld [vmem:[#allocation10 + $0x2c] sm:$0xf]
        %v1007 = vld [vmem:[#allocation10 + $0x30] sm:$0xf]
        %v1008 = vld [vmem:[#allocation10 + $0x34] sm:$0xf]
        %v1009 = vld [vmem:[#allocation10 + $0x38] sm:$0xf]
        %v1010 = vld [vmem:[#allocation10 + $0x3c] sm:$0xf]
        %v1011 = vld [vmem:[%s7] sm:$0x1]
        %v1013 = vperm.slane %v1011, 0
        %v1031 = vunpack.c.l.b16 %v995
        %v1032 = vunpack.c.l.b16 %v996
        %v1033 = vunpack.c.l.b16 %v997
        %v1034 = vunpack.c.l.b16 %v998
        %v1035 = vunpack.c.l.b16 %v999
        %v1036 = vunpack.c.l.b16 %v1000
        %v1037 = vunpack.c.l.b16 %v1001
        %v1038 = vunpack.c.l.b16 %v1002
        %v1039 = vunpack.c.l.b16 %v1003
        %v1040 = vunpack.c.l.b16 %v1004
        %v1041 = vunpack.c.l.b16 %v1005
        %v1042 = vunpack.c.l.b16 %v1006
        %v1043 = vunpack.c.l.b16 %v1007
        %v1044 = vunpack.c.l.b16 %v1008
        %v1045 = vunpack.c.l.b16 %v1009
        %v1046 = vunpack.c.l.b16 %v1010
        %v1047 = vpack.c.b16 %v1032, %v1031
        %v1048 = vpack.c.b16 %v1034, %v1033
        %v1049 = vpack.c.b16 %v1036, %v1035
        %v1050 = vpack.c.b16 %v1038, %v1037
        %v1051 = vpack.c.b16 %v1040, %v1039
        %v1052 = vpack.c.b16 %v1042, %v1041
        %v1053 = vpack.c.b16 %v1044, %v1043
        %v1054 = vpack.c.b16 %v1046, %v1045
        %1063 = vmatpush.bf16.msra.mxu0 %v1054
        %1064 = vmatpush.bf16.msra.mxu0 %v1053
        %1065 = vmatpush.bf16.msra.mxu0 %v1052
        %1066 = vmatpush.bf16.msra.mxu0 %v1051
        %1067 = vmatpush.bf16.msra.mxu0 %v1050
        %1068 = vmatpush.bf16.msra.mxu0 %v1049
        %1069 = vmatpush.bf16.msra.mxu0 %v1048
        %1070 = vmatpush.bf16.msra.mxu0 %v1047
        %1071 = vmatmul.bf16.gmra.mxu0 %v991
        %v1072 = vpop.f32.mrf.mxu0
        %v1073 = vadd.f32 %v1013, %v1072
        %v1074 = vpop.f32.mrf.mxu0
        %v1075 = vadd.f32 %v1013, %v1074
        %1076 = vmatmul.bf16.gmra.mxu0 %v992
        %v1077 = vpop.f32.mrf.mxu0
        %v1078 = vadd.f32 %v1013, %v1077
        %v1079 = vpop.f32.mrf.mxu0
        %v1080 = vadd.f32 %v1013, %v1079
        %1081 = vmatmul.bf16.gmra.mxu0 %v993
        %v1082 = vpop.f32.mrf.mxu0
        %v1083 = vadd.f32 %v1013, %v1082
        %v1084 = vpop.f32.mrf.mxu0
        %v1085 = vadd.f32 %v1013, %v1084
        %1086 = vmatmul.bf16.gmra.mxu0 %v994
        %v1087 = vpop.f32.mrf.mxu0
        %v1088 = vadd.f32 %v1013, %v1087
        %v1089 = vpop.f32.mrf.mxu0
        %v1090 = vadd.f32 %v1013, %v1089
        %1091 = vdwg.mxu0
        %v1092 = vmax.f32 %v1073, 0.0
        %v1093 = vmax.f32 %v1075, 0.0
        %v1094 = vmax.f32 %v1078, 0.0
        %v1095 = vmax.f32 %v1080, 0.0
        %v1096 = vmax.f32 %v1083, 0.0
        %v1097 = vmax.f32 %v1085, 0.0
        %v1098 = vmax.f32 %v1088, 0.0
        %v1099 = vmax.f32 %v1090, 0.0
        %v1100 = vpack.c.bf16 %v1093, %v1092
        %v1101 = vpack.c.bf16 %v1095, %v1094
        %v1102 = vpack.c.bf16 %v1097, %v1096
        %v1103 = vpack.c.bf16 %v1099, %v1098
        %v1104 = vld [vmem:[#allocation11] sm:$0xf]
        %v1105 = vld [vmem:[#allocation11 + $0x4] sm:$0xf]
        %v1106 = vld [vmem:[#allocation11 + $0x8] sm:$0xf]
        %v1107 = vld [vmem:[#allocation11 + $0xc] sm:$0xf]
        %v1108 = vld [vmem:[#allocation11 + $0x10] sm:$0xf]
        %v1109 = vld [vmem:[#allocation11 + $0x14] sm:$0xf]
        %v1110 = vld [vmem:[#allocation11 + $0x18] sm:$0xf]
        %v1111 = vld [vmem:[#allocation11 + $0x1c] sm:$0xf]
        %v1112 = vld [vmem:[#allocation11 + $0x20] sm:$0xf]
        %v1113 = vld [vmem:[#allocation11 + $0x24] sm:$0xf]
        %v1114 = vld [vmem:[#allocation11 + $0x28] sm:$0xf]
        %v1115 = vld [vmem:[#allocation11 + $0x2c] sm:$0xf]
        %v1116 = vld [vmem:[#allocation11 + $0x30] sm:$0xf]
        %v1117 = vld [vmem:[#allocation11 + $0x34] sm:$0xf]
        %v1118 = vld [vmem:[#allocation11 + $0x38] sm:$0xf]
        %v1119 = vld [vmem:[#allocation11 + $0x3c] sm:$0xf]
        %v1120 = vld [vmem:[%s9] sm:$0x1]
        %v1122 = vperm.slane %v1120, 0
        %v1140 = vunpack.c.l.b16 %v1104
        %v1141 = vunpack.c.l.b16 %v1105
        %v1142 = vunpack.c.l.b16 %v1106
        %v1143 = vunpack.c.l.b16 %v1107
        %v1144 = vunpack.c.l.b16 %v1108
        %v1145 = vunpack.c.l.b16 %v1109
        %v1146 = vunpack.c.l.b16 %v1110
        %v1147 = vunpack.c.l.b16 %v1111
        %v1148 = vunpack.c.l.b16 %v1112
        %v1149 = vunpack.c.l.b16 %v1113
        %v1150 = vunpack.c.l.b16 %v1114
        %v1151 = vunpack.c.l.b16 %v1115
        %v1152 = vunpack.c.l.b16 %v1116
        %v1153 = vunpack.c.l.b16 %v1117
        %v1154 = vunpack.c.l.b16 %v1118
        %v1155 = vunpack.c.l.b16 %v1119
        %v1156 = vpack.c.b16 %v1141, %v1140
        %v1157 = vpack.c.b16 %v1143, %v1142
        %v1158 = vpack.c.b16 %v1145, %v1144
        %v1159 = vpack.c.b16 %v1147, %v1146
        %v1160 = vpack.c.b16 %v1149, %v1148
        %v1161 = vpack.c.b16 %v1151, %v1150
        %v1162 = vpack.c.b16 %v1153, %v1152
        %v1163 = vpack.c.b16 %v1155, %v1154
        %1172 = vmatpush.bf16.msra.mxu0 %v1163
        %1173 = vmatpush.bf16.msra.mxu0 %v1162
        %1174 = vmatpush.bf16.msra.mxu0 %v1161
        %1175 = vmatpush.bf16.msra.mxu0 %v1160
        %1176 = vmatpush.bf16.msra.mxu0 %v1159
        %1177 = vmatpush.bf16.msra.mxu0 %v1158
        %1178 = vmatpush.bf16.msra.mxu0 %v1157
        %1179 = vmatpush.bf16.msra.mxu0 %v1156
        %1180 = vmatmul.bf16.gmra.mxu0 %v1100
        %v1181 = vpop.f32.mrf.mxu0
        %v1182 = vadd.f32 %v1122, %v1181
        %v1183 = vpop.f32.mrf.mxu0
        %v1184 = vadd.f32 %v1122, %v1183
        %1185 = vmatmul.bf16.gmra.mxu0 %v1101
        %v1186 = vpop.f32.mrf.mxu0
        %v1187 = vadd.f32 %v1122, %v1186
        %v1188 = vpop.f32.mrf.mxu0
        %v1189 = vadd.f32 %v1122, %v1188
        %1190 = vmatmul.bf16.gmra.mxu0 %v1102
        %v1191 = vpop.f32.mrf.mxu0
        %v1192 = vadd.f32 %v1122, %v1191
        %v1193 = vpop.f32.mrf.mxu0
        %v1194 = vadd.f32 %v1122, %v1193
        %1195 = vmatmul.bf16.gmra.mxu0 %v1103
        %v1196 = vpop.f32.mrf.mxu0
        %v1197 = vadd.f32 %v1122, %v1196
        %v1198 = vpop.f32.mrf.mxu0
        %v1199 = vadd.f32 %v1122, %v1198
        %1200 = vdwg.mxu0
        %v1201 = vpack.c.bf16 %v1184, %v1182
        %v1202 = vpack.c.bf16 %v1189, %v1187
        %v1203 = vpack.c.bf16 %v1194, %v1192
        %v1204 = vpack.c.bf16 %v1199, %v1197
        %v1205 = vld [vmem:[#allocation5] sm:$0xf]
        %vm1206 = vcmask 523264
        %v1208 = vsel %vm1206, %v1205, 0
        %1210 = vmatpush.bf16.msra.mxu0 0
        %1211 = vmatpush.bf16.msra.mxu0 0
        %1212 = vmatpush.bf16.msra.mxu0 0
        %1213 = vmatpush.bf16.msra.mxu0 0
        %1214 = vmatpush.bf16.msra.mxu0 %v1204
        %1215 = vmatpush.bf16.msra.mxu0 %v1203
        %1216 = vmatpush.bf16.msra.mxu0 %v1202
        %1217 = vmatpush.bf16.msra.mxu0 %v1201
        %1218 = vmatmul.bf16.gmra.mxu0 %v1208
        %v1219 = vpop.f32.mrf.mxu0
        %v1220 = vadd.f32 0.0, %v1219
        %v1221 = vpop.f32.mrf.mxu0
        %1222 = vdwg.mxu0
        %v1223 = vmul.f32 %v1220, 0.125
        %v1224 = vpack.c.bf16 %v1223, %v1223
        %v1225 = vld [vmem:[#allocation13] sm:$0xf]
        %v1226 = vld [vmem:[#allocation13 + $0x4] sm:$0xf]
        %v1227 = vld [vmem:[#allocation13 + $0x8] sm:$0xf]
        %v1228 = vld [vmem:[#allocation13 + $0xc] sm:$0xf]
        %v1229 = vld [vmem:[#allocation13 + $0x10] sm:$0xf]
        %v1230 = vld [vmem:[#allocation13 + $0x14] sm:$0xf]
        %v1231 = vld [vmem:[#allocation13 + $0x18] sm:$0xf]
        %v1232 = vld [vmem:[#allocation13 + $0x1c] sm:$0xf]
        %v1233 = vld [vmem:[#allocation13 + $0x20] sm:$0xf]
        %v1234 = vld [vmem:[#allocation13 + $0x24] sm:$0xf]
        %v1235 = vld [vmem:[#allocation13 + $0x28] sm:$0xf]
        %v1236 = vld [vmem:[#allocation13 + $0x2c] sm:$0xf]
        %v1237 = vld [vmem:[#allocation13 + $0x30] sm:$0xf]
        %v1238 = vld [vmem:[#allocation13 + $0x34] sm:$0xf]
        %v1239 = vld [vmem:[#allocation13 + $0x38] sm:$0xf]
        %v1240 = vld [vmem:[#allocation13 + $0x3c] sm:$0xf]
        %v1241 = vld [vmem:[%s11] sm:$0x1]
        %v1243 = vperm.slane %v1241, 0
        %v1261 = vunpack.c.l.b16 %v1225
        %v1262 = vunpack.c.l.b16 %v1226
        %v1263 = vunpack.c.l.b16 %v1227
        %v1264 = vunpack.c.l.b16 %v1228
        %v1265 = vunpack.c.l.b16 %v1229
        %v1266 = vunpack.c.l.b16 %v1230
        %v1267 = vunpack.c.l.b16 %v1231
        %v1268 = vunpack.c.l.b16 %v1232
        %v1269 = vunpack.c.l.b16 %v1233
        %v1270 = vunpack.c.l.b16 %v1234
        %v1271 = vunpack.c.l.b16 %v1235
        %v1272 = vunpack.c.l.b16 %v1236
        %v1273 = vunpack.c.l.b16 %v1237
        %v1274 = vunpack.c.l.b16 %v1238
        %v1275 = vunpack.c.l.b16 %v1239
        %v1276 = vunpack.c.l.b16 %v1240
        %v1277 = vpack.c.b16 %v1262, %v1261
        %v1278 = vpack.c.b16 %v1264, %v1263
        %v1279 = vpack.c.b16 %v1266, %v1265
        %v1280 = vpack.c.b16 %v1268, %v1267
        %v1281 = vpack.c.b16 %v1270, %v1269
        %v1282 = vpack.c.b16 %v1272, %v1271
        %v1283 = vpack.c.b16 %v1274, %v1273
        %v1284 = vpack.c.b16 %v1276, %v1275
        %1293 = vmatpush.bf16.msra.mxu0 %v1284
        %1294 = vmatpush.bf16.msra.mxu0 %v1283
        %1295 = vmatpush.bf16.msra.mxu0 %v1282
        %1296 = vmatpush.bf16.msra.mxu0 %v1281
        %1297 = vmatpush.bf16.msra.mxu0 %v1280
        %1298 = vmatpush.bf16.msra.mxu0 %v1279
        %1299 = vmatpush.bf16.msra.mxu0 %v1278
        %1300 = vmatpush.bf16.msra.mxu0 %v1277
        %1301 = vmatmul.bf16.gmra.mxu0 %v1224
        %v1302 = vpop.f32.mrf.mxu0
        %v1303 = vadd.f32 %v1243, %v1302
        %v1304 = vpop.f32.mrf.mxu0
        %1305 = vdwg.mxu0
        %v1306 = vmax.f32 %v1303, 0.0
        %v1307 = vpack.c.bf16 %v1306, %v1306
        %v1308 = vld [vmem:[#allocation14] sm:$0xf]
        %v1309 = vld [vmem:[#allocation14 + $0x4] sm:$0xf]
        %v1310 = vld [vmem:[#allocation14 + $0x8] sm:$0xf]
        %v1311 = vld [vmem:[#allocation14 + $0xc] sm:$0xf]
        %v1312 = vld [vmem:[#allocation14 + $0x10] sm:$0xf]
        %v1313 = vld [vmem:[#allocation14 + $0x14] sm:$0xf]
        %v1314 = vld [vmem:[#allocation14 + $0x18] sm:$0xf]
        %v1315 = vld [vmem:[#allocation14 + $0x1c] sm:$0xf]
        %v1316 = vld [vmem:[#allocation14 + $0x20] sm:$0xf]
        %v1317 = vld [vmem:[#allocation14 + $0x24] sm:$0xf]
        %v1318 = vld [vmem:[#allocation14 + $0x28] sm:$0xf]
        %v1319 = vld [vmem:[#allocation14 + $0x2c] sm:$0xf]
        %v1320 = vld [vmem:[#allocation14 + $0x30] sm:$0xf]
        %v1321 = vld [vmem:[#allocation14 + $0x34] sm:$0xf]
        %v1322 = vld [vmem:[#allocation14 + $0x38] sm:$0xf]
        %v1323 = vld [vmem:[#allocation14 + $0x3c] sm:$0xf]
        %v1324 = vld [vmem:[%s13] sm:$0x1]
        %v1326 = vperm.slane %v1324, 0
        %v1344 = vunpack.c.l.b16 %v1308
        %v1345 = vunpack.c.l.b16 %v1309
        %v1346 = vunpack.c.l.b16 %v1310
        %v1347 = vunpack.c.l.b16 %v1311
        %v1348 = vunpack.c.l.b16 %v1312
        %v1349 = vunpack.c.l.b16 %v1313
        %v1350 = vunpack.c.l.b16 %v1314
        %v1351 = vunpack.c.l.b16 %v1315
        %v1352 = vunpack.c.l.b16 %v1316
        %v1353 = vunpack.c.l.b16 %v1317
        %v1354 = vunpack.c.l.b16 %v1318
        %v1355 = vunpack.c.l.b16 %v1319
        %v1356 = vunpack.c.l.b16 %v1320
        %v1357 = vunpack.c.l.b16 %v1321
        %v1358 = vunpack.c.l.b16 %v1322
        %v1359 = vunpack.c.l.b16 %v1323
        %v1360 = vpack.c.b16 %v1345, %v1344
        %v1361 = vpack.c.b16 %v1347, %v1346
        %v1362 = vpack.c.b16 %v1349, %v1348
        %v1363 = vpack.c.b16 %v1351, %v1350
        %v1364 = vpack.c.b16 %v1353, %v1352
        %v1365 = vpack.c.b16 %v1355, %v1354
        %v1366 = vpack.c.b16 %v1357, %v1356
        %v1367 = vpack.c.b16 %v1359, %v1358
        %1376 = vmatpush.bf16.msra.mxu0 %v1367
        %1377 = vmatpush.bf16.msra.mxu0 %v1366
        %1378 = vmatpush.bf16.msra.mxu0 %v1365
        %1379 = vmatpush.bf16.msra.mxu0 %v1364
        %1380 = vmatpush.bf16.msra.mxu0 %v1363
        %1381 = vmatpush.bf16.msra.mxu0 %v1362
        %1382 = vmatpush.bf16.msra.mxu0 %v1361
        %1383 = vmatpush.bf16.msra.mxu0 %v1360
        %1384 = vmatmul.bf16.gmra.mxu0 %v1307
        %v1385 = vpop.f32.mrf.mxu0
        %v1386 = vadd.f32 %v1326, %v1385
        %v1387 = vpop.f32.mrf.mxu0
        %1388 = vdwg.mxu0
        %v1389 = vmax.f32 %v1386, 0.0
        %v1390 = vpack.c.bf16 %v1389, %v1389
        %v1391 = vld [vmem:[#allocation16] sm:$0xf]
        %v1392 = vld [vmem:[#allocation16 + $0x4] sm:$0xf]
        %v1393 = vld [vmem:[#allocation16 + $0x8] sm:$0xf]
        %v1394 = vld [vmem:[#allocation16 + $0xc] sm:$0xf]
        %v1395 = vld [vmem:[#allocation16 + $0x10] sm:$0xf]
        %v1396 = vld [vmem:[#allocation16 + $0x14] sm:$0xf]
        %v1397 = vld [vmem:[#allocation16 + $0x18] sm:$0xf]
        %v1398 = vld [vmem:[#allocation16 + $0x1c] sm:$0xf]
        %v1399 = vld [vmem:[#allocation16 + $0x20] sm:$0xf]
        %v1400 = vld [vmem:[#allocation16 + $0x24] sm:$0xf]
        %v1401 = vld [vmem:[#allocation16 + $0x28] sm:$0xf]
        %v1402 = vld [vmem:[#allocation16 + $0x2c] sm:$0xf]
        %v1403 = vld [vmem:[#allocation16 + $0x30] sm:$0xf]
        %v1404 = vld [vmem:[#allocation16 + $0x34] sm:$0xf]
        %v1405 = vld [vmem:[#allocation16 + $0x38] sm:$0xf]
        %v1406 = vld [vmem:[#allocation16 + $0x3c] sm:$0xf]
        %v1407 = vld [vmem:[%s15] sm:$0x1]
        %v1409 = vperm.slane %v1407, 0
        %v1427 = vunpack.c.l.b16 %v1391
        %v1428 = vunpack.c.l.b16 %v1392
        %v1429 = vunpack.c.l.b16 %v1393
        %v1430 = vunpack.c.l.b16 %v1394
        %v1431 = vunpack.c.l.b16 %v1395
        %v1432 = vunpack.c.l.b16 %v1396
        %v1433 = vunpack.c.l.b16 %v1397
        %v1434 = vunpack.c.l.b16 %v1398
        %v1435 = vunpack.c.l.b16 %v1399
        %v1436 = vunpack.c.l.b16 %v1400
        %v1437 = vunpack.c.l.b16 %v1401
        %v1438 = vunpack.c.l.b16 %v1402
        %v1439 = vunpack.c.l.b16 %v1403
        %v1440 = vunpack.c.l.b16 %v1404
        %v1441 = vunpack.c.l.b16 %v1405
        %v1442 = vunpack.c.l.b16 %v1406
        %v1443 = vpack.c.b16 %v1428, %v1427
        %v1444 = vpack.c.b16 %v1430, %v1429
        %v1445 = vpack.c.b16 %v1432, %v1431
        %v1446 = vpack.c.b16 %v1434, %v1433
        %v1447 = vpack.c.b16 %v1436, %v1435
        %v1448 = vpack.c.b16 %v1438, %v1437
        %v1449 = vpack.c.b16 %v1440, %v1439
        %v1450 = vpack.c.b16 %v1442, %v1441
        %1459 = vmatpush.bf16.msra.mxu0 %v1450
        %1460 = vmatpush.bf16.msra.mxu0 %v1449
        %1461 = vmatpush.bf16.msra.mxu0 %v1448
        %1462 = vmatpush.bf16.msra.mxu0 %v1447
        %1463 = vmatpush.bf16.msra.mxu0 %v1446
        %1464 = vmatpush.bf16.msra.mxu0 %v1445
        %1465 = vmatpush.bf16.msra.mxu0 %v1444
        %1466 = vmatpush.bf16.msra.mxu0 %v1443
        %1467 = vmatmul.bf16.gmra.mxu0 %v1390
        %v1468 = vpop.f32.mrf.mxu0
        %v1469 = vadd.f32 %v1409, %v1468
        %v1470 = vpop.f32.mrf.mxu0
        %1471 = vdwg.mxu0
        %v1472 = vmax.f32 %v1469, 0.0
        %v1473 = vpack.c.bf16 %v1472, %v1472
        %v1474 = vld [vmem:[#allocation17] sm:$0xf]
        %v1475 = vld [vmem:[#allocation17 + $0x4] sm:$0xf]
        %v1476 = vld [vmem:[#allocation17 + $0x8] sm:$0xf]
        %v1477 = vld [vmem:[#allocation17 + $0xc] sm:$0xf]
        %v1478 = vld [vmem:[#allocation17 + $0x10] sm:$0xf]
        %v1479 = vld [vmem:[#allocation17 + $0x14] sm:$0xf]
        %v1480 = vld [vmem:[#allocation17 + $0x18] sm:$0xf]
        %v1481 = vld [vmem:[#allocation17 + $0x1c] sm:$0xf]
        %v1482 = vld [vmem:[#allocation17 + $0x20] sm:$0xf]
        %v1483 = vld [vmem:[#allocation17 + $0x24] sm:$0xf]
        %v1484 = vld [vmem:[#allocation17 + $0x28] sm:$0xf]
        %v1485 = vld [vmem:[#allocation17 + $0x2c] sm:$0xf]
        %v1486 = vld [vmem:[#allocation17 + $0x30] sm:$0xf]
        %v1487 = vld [vmem:[#allocation17 + $0x34] sm:$0xf]
        %v1488 = vld [vmem:[#allocation17 + $0x38] sm:$0xf]
        %v1489 = vld [vmem:[#allocation17 + $0x3c] sm:$0xf]
        %v1490 = vld [vmem:[%s17] sm:$0x1]
        %v1492 = vperm.slane %v1490, 0
        %v1510 = vunpack.c.l.b16 %v1474
        %v1511 = vunpack.c.l.b16 %v1475
        %v1512 = vunpack.c.l.b16 %v1476
        %v1513 = vunpack.c.l.b16 %v1477
        %v1514 = vunpack.c.l.b16 %v1478
        %v1515 = vunpack.c.l.b16 %v1479
        %v1516 = vunpack.c.l.b16 %v1480
        %v1517 = vunpack.c.l.b16 %v1481
        %v1518 = vunpack.c.l.b16 %v1482
        %v1519 = vunpack.c.l.b16 %v1483
        %v1520 = vunpack.c.l.b16 %v1484
        %v1521 = vunpack.c.l.b16 %v1485
        %v1522 = vunpack.c.l.b16 %v1486
        %v1523 = vunpack.c.l.b16 %v1487
        %v1524 = vunpack.c.l.b16 %v1488
        %v1525 = vunpack.c.l.b16 %v1489
        %v1526 = vpack.c.b16 %v1511, %v1510
        %v1527 = vpack.c.b16 %v1513, %v1512
        %v1528 = vpack.c.b16 %v1515, %v1514
        %v1529 = vpack.c.b16 %v1517, %v1516
        %v1530 = vpack.c.b16 %v1519, %v1518
        %v1531 = vpack.c.b16 %v1521, %v1520
        %v1532 = vpack.c.b16 %v1523, %v1522
        %v1533 = vpack.c.b16 %v1525, %v1524
        %1542 = vmatpush.bf16.msra.mxu0 %v1533
        %1543 = vmatpush.bf16.msra.mxu0 %v1532
        %1544 = vmatpush.bf16.msra.mxu0 %v1531
        %1545 = vmatpush.bf16.msra.mxu0 %v1530
        %1546 = vmatpush.bf16.msra.mxu0 %v1529
        %1547 = vmatpush.bf16.msra.mxu0 %v1528
        %1548 = vmatpush.bf16.msra.mxu0 %v1527
        %1549 = vmatpush.bf16.msra.mxu0 %v1526
        %1550 = vmatmul.bf16.gmra.mxu0 %v1473
        %v1551 = vpop.f32.mrf.mxu0
        %v1552 = vadd.f32 %v1492, %v1551
        %v1553 = vpop.f32.mrf.mxu0
        %1554 = vdwg.mxu0
        %1555 = vst [vmem:[%s742] sm:$0xff] %v1552
        %s1556 = sand.u32 %s431, 1
        %s1557 = scalar_lea.sflag [#allocation4], %s1556
        %s1558 = sand.u32 %s431, 1
        %s1559 = smul.addr %s1558, 8
        %s1560 = scalar_lea.vmem [#allocation19], %s1559
        // Predicated region
        $region133: #{tpu_custom_call.1} parent=91 // pred_check
          %p1561 = pneg %p441
        $region134: #{tpu_custom_call.1} parent=91 // pred_check_branch
          %1563 = sbr.rel (%p1561) target = $region136
        $region135: #{tpu_custom_call.1} parent=91 // pred_region
          %1565 = vsyncadd %s1557, 0
          %s1566 = smul.addr %s40, 8
          %s1567 = scalar_lea.hbm %s18, %s1566
          %s1569 = sshll.u32 %s1560, 4
          %s1570 = int_to_ptr.vmem [resolvable:$true] %s1569
          %s1571 = sshll.u32 %s1567, 4
          %s1572 = int_to_ptr.hbm [resolvable:$true] %s1571
          %1574 = dma.vmem_to_hbm [thread:$0]  %s1570, 128, %s1572, %s1557
        $region136: #{tpu_custom_call.1} parent=91 // pred_fallthru
          _
      $region92: #{tpu_custom_call.1} parent=5 // pred_fallthru
        _
      %p1575 = scmp.le.s32.totalorder 2, %s35
      // Predicated region
      $region137: #{tpu_custom_call.1} parent=5 // pred_check
        %p1576 = pneg %p1575
      $region138: #{tpu_custom_call.1} parent=5 // pred_check_branch
        %1578 = sbr.rel (%p1576) target = $region140
      $region139: #{tpu_custom_call.1} parent=5 // pred_region
        %s1579 = ssub.s32 %s35, 2
        // Predicated region
        $region141: #{tpu_custom_call.1} parent=139 // pred_check
          %p1580 = pneg %p447
        $region142: #{tpu_custom_call.1} parent=139 // pred_check_branch
          %1582 = sbr.rel (%p1580) target = $region144
        $region143: #{tpu_custom_call.1} parent=139 // pred_region
          %s1583 = sand.u32 %s432, 1
          %s1584 = scalar_lea.sflag [#allocation4], %s1583
          %s1585 = sand.u32 %s432, 1
          %s1586 = smul.addr %s1585, 8
          %s1587 = scalar_lea.vmem [#allocation19], %s1586
          %1589 = dma.done %s1584, 128
        $region144: #{tpu_custom_call.1} parent=139 // pred_fallthru
          _
      $region140: #{tpu_custom_call.1} parent=5 // pred_fallthru
        _
    $region6: #{tpu_custom_call.1} parent=1 // loop_footer
      %s39 = sadd.s32 1, %s35
    $region7: #{tpu_custom_call.1} parent=1 // loop_footer_branch
      %34 = sbr.rel target = $region3
    $region8: #{tpu_custom_call.1} parent=1 // loop_exit
      _
    %1590 = vsyncpa [#allocation3], 1
    %s1591 = scalar_lea.sflag [#allocation3], 1
    %1592 = vsyncpa %s1591, 1
    %1593 = vsyncpa [#allocation6], 1
    %1594 = vsyncpa [#allocation9], 1
    %1595 = vsyncpa [#allocation12], 1
    %1596 = vsyncpa [#allocation15], 1
    %1597 = vsyncpa [#allocation18], 1
    %1598 = vsyncpa [#allocation4], 1
    %s1599 = scalar_lea.sflag [#allocation4], 1
    %1600 = vsyncpa %s1599, 1

</llo_original>
